<compile_context>
chip_gen: v6e
topology: v6e:2x2x1
jax: 0.10.0
libtpu: 0.0.40
codegen_flags: <defaults>
</compile_context>

<pallas_src>
import functools

import jax
import jax.numpy as jnp
from jax.experimental import pallas as pl
from jax.experimental.pallas import tpu as pltpu


def refiner_kernel(x_ref, m_ref,
                   w1_ref, b1_ref, w2_ref, b2_ref,
                   w3_ref, b3_ref, wr_ref, br_ref,
                   out_ref, slab_ref, *, H, W, c_img):
    HW = H * W

    # Host-precomputed 0/1 boundary masks (f32), resident across grid steps.
    m = m_ref[...]                       # (4, HW)
    cm1 = m[0:1, :]                      # col >= 1     (valid src for dx = -1)
    cp1 = m[1:2, :]                      # col <= W-2   (valid src for dx = +1)
    rm1 = m[2:3, :]                      # row >= 1     (valid dst for dy = -1)
    rp1 = m[3:4, :]                      # row <= H-2   (valid dst for dy = +1)

    def conv3x3(x, w_ref, b_ref, relu):
        """x: (Cin_pad, HW) f32; w_ref: (3, Cout, 3*Cin_pad) bf16 stacked by
        kernel row (dy); b_ref: (Cout, 1) f32  ->  (Cout, HW) f32."""
        cin = x.shape[0]                 # multiple of 8 (padded in wrapper)
        k = 3 * cin

        # dx factorization: 3 column-shifted copies -> bf16 slab in VMEM
        # scratch, stored at static 8-aligned row offsets.
        left = pltpu.roll(x, 1, 1) * cm1           # x[.., p-1] (dx = -1)
        right = pltpu.roll(x, HW - 1, 1) * cp1     # x[.., p+1] (dx = +1)
        slab_ref[0:cin, :] = left.astype(jnp.bfloat16)
        slab_ref[cin:2 * cin, :] = x.astype(jnp.bfloat16)
        slab_ref[2 * cin:k, :] = right.astype(jnp.bfloat16)
        slab = slab_ref[0:k, :]                    # (3*Cin_pad, HW) bf16

        # dy factorization: one MXU dot per kernel row (bf16 operands, f32
        # accumulate), then shift/mask the (Cout, HW) partials by +-W rows.
        w = w_ref[...]                             # (3, Cout, 3*Cin_pad) bf16
        z0 = jnp.dot(w[0], slab, preferred_element_type=jnp.float32)
        z1 = jnp.dot(w[1], slab, preferred_element_type=jnp.float32)
        z2 = jnp.dot(w[2], slab, preferred_element_type=jnp.float32)
        y = (z1
             + pltpu.roll(z0, W, 1) * rm1          # dy = -1 contribution
             + pltpu.roll(z2, HW - W, 1) * rp1     # dy = +1 contribution
             + b_ref[...])
        return jnp.maximum(y, 0.0) if relu else y

    x0 = x_ref[0]                        # (Cin_pad, HW): [img, depth, zeros]
    d = x0[c_img:c_img + 1, :]           # depth_init row, (1, HW)

    h = conv3x3(x0, w1_ref, b1_ref, True)
    h = conv3x3(h, w2_ref, b2_ref, True)
    h = conv3x3(h, w3_ref, b3_ref, True)
    r = conv3x3(h, wr_ref, br_ref, False)          # (1, HW) depth residual

    out_ref[0] = (d + r).astype(out_ref.dtype)


def _round_up8(v):
    return -(-v // 8) * 8


def _prep_weight(w, cin_pad, cout_pad):
    """HWIO (3,3,Cin,Cout) -> (3, Cout_pad, 3*Cin_pad) bf16, stacked by dy.

    Column layout of the K axis is (kx, ci) with kx outer, matching the slab
    block order [dx=-1, dx=0, dx=+1]."""
    kh, kw, cin, cout = w.shape
    wp = jnp.zeros((kh, kw, cin_pad, cout_pad), jnp.float32)
    wp = wp.at[:, :, :cin, :cout].set(w.astype(jnp.float32))
    wt = jnp.transpose(wp, (0, 3, 1, 2)).reshape(kh, cout_pad, kw * cin_pad)
    return wt.astype(jnp.bfloat16)


def _prep_bias(b, cout_pad):
    """(1, Cout) -> (Cout_pad, 1) f32 column for a lane-broadcast add."""
    cout = b.shape[1]
    bp = jnp.zeros((cout_pad, 1), jnp.float32)
    return bp.at[:cout, 0].set(b[0].astype(jnp.float32))


def basic_refiner(img, depth_init, params):
    """img: (N, Cimg, H, W), depth_init: (N, 1, H, W), NCHW (PyTorch layout)."""
    N, Cimg, H, W = img.shape
    HW = H * W
    w1, b1, w2, b2, w3, b3, wr, br = params
    c = w1.shape[-1]
    cin = Cimg + 1
    cp0 = _round_up8(cin)                # padded input channels of conv1
    cp = _round_up8(c)                   # padded hidden channels

    # Channel-padded, channel-concatenated input slab (N, cp0, HW):
    # [img, depth_init, zeros].  Built once in the wrapper so every in-kernel
    # row group is 8-sublane aligned (no unaligned VMEM concat in the kernel).
    x0 = jnp.concatenate(
        [img.reshape(N, Cimg, HW).astype(jnp.float32),
         depth_init.reshape(N, 1, HW).astype(jnp.float32),
         jnp.zeros((N, cp0 - cin, HW), jnp.float32)], axis=1)

    # Host-precomputed 0/1 boundary masks: no vector int div/mod in-kernel.
    lane = jnp.arange(HW, dtype=jnp.int32)
    col = lane % W
    row = lane // W
    masks = jnp.stack([(col >= 1), (col <= W - 2),
                       (row >= 1), (row <= H - 2)]).astype(jnp.float32)

    w1t = _prep_weight(w1, cp0, cp); b1c = _prep_bias(b1, cp)
    w2t = _prep_weight(w2, cp, cp);  b2c = _prep_bias(b2, cp)
    w3t = _prep_weight(w3, cp, cp);  b3c = _prep_bias(b3, cp)
    wrt = _prep_weight(wr, cp, 1);   brc = _prep_bias(br, 1)

    kernel = functools.partial(refiner_kernel, H=H, W=W, c_img=Cimg)

    def resident(shape):
        nd = len(shape)
        return pl.BlockSpec(shape, lambda n, _nd=nd: (0,) * _nd)

    flops = 2 * N * HW * 9 * (cp0 * cp + 2 * cp * cp + cp)
    bytes_accessed = (4 * (x0.size + N * HW + masks.size)
                      + 2 * sum(a.size for a in (w1t, w2t, w3t, wrt))
                      + 4 * sum(a.size for a in (b1c, b2c, b3c, brc)))

    out = pl.pallas_call(
        kernel,
        out_shape=jax.ShapeDtypeStruct((N, 1, HW), jnp.float32),
        grid=(N,),
        in_specs=[
            pl.BlockSpec((1, cp0, HW), lambda n: (n, 0, 0)),
            resident(masks.shape),
            resident(w1t.shape), resident(b1c.shape),
            resident(w2t.shape), resident(b2c.shape),
            resident(w3t.shape), resident(b3c.shape),
            resident(wrt.shape), resident(brc.shape),
        ],
        out_specs=pl.BlockSpec((1, 1, HW), lambda n: (n, 0, 0)),
        scratch_shapes=[pltpu.VMEM((3 * max(cp0, cp), HW), jnp.bfloat16)],
        compiler_params=pltpu.CompilerParams(
            dimension_semantics=("parallel",)),
        cost_estimate=pl.CostEstimate(
            flops=flops, transcendentals=0, bytes_accessed=bytes_accessed),
    )(x0, masks, w1t, b1c, w2t, b2c, w3t, b3c, wrt, brc)

    return out.reshape(N, 1, H, W)                 # back to NCHW (N, 1, H, W)


def init_params(key, in_channels, c):
    """Deterministic synthetic weights. Conv weights are HWIO (3,3,Cin,Cout)."""
    ks = jax.random.split(key, 8)

    def conv_w(k, cin, cout):
        fan_in = cin * 9
        return (jax.random.normal(k, (3, 3, cin, cout), jnp.float32)
                / jnp.sqrt(fan_in))

    def conv_b(k, cout):
        return 0.01 * jax.random.normal(k, (1, cout), jnp.float32)

    w1, b1 = conv_w(ks[0], in_channels, c), conv_b(ks[1], c)
    w2, b2 = conv_w(ks[2], c, c), conv_b(ks[3], c)
    w3, b3 = conv_w(ks[4], c, c), conv_b(ks[5], c)
    wr, br = conv_w(ks[6], c, 1), conv_b(ks[7], 1)
    return (w1, b1, w2, b2, w3, b3, wr, br)


def ref_forward(img, depth_init, params, dot_dtype=jnp.float32):
    """Plain-JAX NCHW reference.  With dot_dtype=bfloat16 it emulates the
    kernel's bf16-operand / f32-accumulate matmuls (operand rounding only)."""
    x = jnp.concatenate([img, depth_init], axis=1)
    w1, b1, w2, b2, w3, b3, wr, br = params

    def conv(h, w, b, relu):
        y = jax.lax.conv_general_dilated(
            h.astype(dot_dtype), w.astype(dot_dtype),
            window_strides=(1, 1), padding="SAME",
            dimension_numbers=("NCHW", "HWIO", "NCHW"),
            preferred_element_type=jnp.float32)
        y = y + b.reshape(1, -1, 1, 1)
        return jnp.maximum(y, 0.0) if relu else y

    h = conv(x, w1, b1, True)
    h = conv(h, w2, b2, True)
    h = conv(h, w3, b3, True)
    r = conv(h, wr, br, False)
    return depth_init + r


if __name__ == "__main__":
    key = jax.random.PRNGKey(0)
    k_img, k_depth, k_par = jax.random.split(key, 3)

    N, Cimg, H, W = 2, 3, 16, 16
    in_channels, c = Cimg + 1, 8

    img = jax.random.normal(k_img, (N, Cimg, H, W), jnp.float32)
    depth_init = jax.random.normal(k_depth, (N, 1, H, W), jnp.float32)
    params = init_params(k_par, in_channels, c)

    out = basic_refiner(img, depth_init, params)
    out = jax.block_until_ready(out)
    assert out.shape == (N, 1, H, W)

    # Tight check vs a reference that emulates the kernel's bf16-operand dots.
    ref_bf16 = jax.block_until_ready(
        ref_forward(img, depth_init, params, dot_dtype=jnp.bfloat16))
    assert jnp.allclose(out, ref_bf16, rtol=1e-3, atol=1e-3), \
        "mismatch vs bf16-operand reference"

    # Loose check vs the exact f32 module semantics (bf16 operand rounding
    # is the only difference).
    ref_f32 = jax.block_until_ready(ref_forward(img, depth_init, params))
    assert jnp.allclose(out, ref_f32, rtol=5e-2, atol=5e-2), \
        "mismatch vs f32 reference"

    print("KERNEL_OK")
</pallas_src>

<mosaic_0001>
module attributes {stable_mosaic.version = 11 : i64} {
  func.func @refiner_kernel(%arg0: i32, %arg1: memref<1x8x256xf32, #tpu.memory_space<vmem>>, %arg2: memref<4x256xf32, #tpu.memory_space<vmem>>, %arg3: memref<3x8x24xbf16, #tpu.memory_space<vmem>>, %arg4: memref<8x1xf32, #tpu.memory_space<vmem>>, %arg5: memref<3x8x24xbf16, #tpu.memory_space<vmem>>, %arg6: memref<8x1xf32, #tpu.memory_space<vmem>>, %arg7: memref<3x8x24xbf16, #tpu.memory_space<vmem>>, %arg8: memref<8x1xf32, #tpu.memory_space<vmem>>, %arg9: memref<3x1x24xbf16, #tpu.memory_space<vmem>>, %arg10: memref<1x1xf32, #tpu.memory_space<vmem>>, %arg11: memref<1x1x256xf32, #tpu.memory_space<vmem>>, %arg12: memref<24x256xbf16, #tpu.memory_space<vmem>>) attributes {dimension_semantics = [#tpu.dimension_semantics<parallel>], iteration_bounds = array<i64: 2>, scalar_prefetch = 0 : i64, scratch_operands = 1 : i64, tpu.core_type = #tpu.core_type<tc>, window_params = [{transform_indices = @transform_0, window_bounds = array<i64: 1, 8, 256>}, {pipeline_mode = #tpu.pipeline_mode<synchronous>, transform_indices = @transform_1, window_bounds = array<i64: 4, 256>}, {pipeline_mode = #tpu.pipeline_mode<synchronous>, transform_indices = @transform_2, window_bounds = array<i64: 3, 8, 24>}, {pipeline_mode = #tpu.pipeline_mode<synchronous>, transform_indices = @transform_3, window_bounds = array<i64: 8, 1>}, {pipeline_mode = #tpu.pipeline_mode<synchronous>, transform_indices = @transform_4, window_bounds = array<i64: 3, 8, 24>}, {pipeline_mode = #tpu.pipeline_mode<synchronous>, transform_indices = @transform_5, window_bounds = array<i64: 8, 1>}, {pipeline_mode = #tpu.pipeline_mode<synchronous>, transform_indices = @transform_6, window_bounds = array<i64: 3, 8, 24>}, {pipeline_mode = #tpu.pipeline_mode<synchronous>, transform_indices = @transform_7, window_bounds = array<i64: 8, 1>}, {pipeline_mode = #tpu.pipeline_mode<synchronous>, transform_indices = @transform_8, window_bounds = array<i64: 3, 1, 24>}, {pipeline_mode = #tpu.pipeline_mode<synchronous>, transform_indices = @transform_9, window_bounds = array<i64: 1, 1>}, {transform_indices = @transform_10, window_bounds = array<i64: 1, 1, 256>}]} {
    %c0 = arith.constant 0 : index
    %c0_0 = arith.constant 0 : index
    %0 = vector.load %arg2[%c0, %c0_0] : memref<4x256xf32, #tpu.memory_space<vmem>>, vector<4x256xf32>
    %1 = vector.extract_strided_slice %0 {offsets = [0, 0], sizes = [1, 256], strides = [1, 1]} : vector<4x256xf32> to vector<1x256xf32>
    %2 = vector.extract_strided_slice %0 {offsets = [1, 0], sizes = [1, 256], strides = [1, 1]} : vector<4x256xf32> to vector<1x256xf32>
    %3 = vector.extract_strided_slice %0 {offsets = [2, 0], sizes = [1, 256], strides = [1, 1]} : vector<4x256xf32> to vector<1x256xf32>
    %4 = vector.extract_strided_slice %0 {offsets = [3, 0], sizes = [1, 256], strides = [1, 1]} : vector<4x256xf32> to vector<1x256xf32>
    %c0_1 = arith.constant 0 : index
    %c0_2 = arith.constant 0 : index
    %c0_3 = arith.constant 0 : index
    %5 = vector.load %arg1[%c0_1, %c0_2, %c0_3] : memref<1x8x256xf32, #tpu.memory_space<vmem>>, vector<1x8x256xf32>
    %6 = vector.shape_cast %5 : vector<1x8x256xf32> to vector<8x256xf32>
    %7 = vector.extract_strided_slice %6 {offsets = [3, 0], sizes = [1, 256], strides = [1, 1]} : vector<8x256xf32> to vector<1x256xf32>
    %c1_i32 = arith.constant 1 : i32
    %8 = tpu.dynamic_rotate %6 by %c1_i32 dim 1 : vector<8x256xf32>, i32 -> vector<8x256xf32>
    %9 = vector.broadcast %1 : vector<1x256xf32> to vector<8x256xf32>
    %10 = arith.mulf %8, %9 : vector<8x256xf32>
    %c255_i32 = arith.constant 255 : i32
    %11 = tpu.dynamic_rotate %6 by %c255_i32 dim 1 : vector<8x256xf32>, i32 -> vector<8x256xf32>
    %12 = vector.broadcast %2 : vector<1x256xf32> to vector<8x256xf32>
    %13 = arith.mulf %11, %12 : vector<8x256xf32>
    %14 = arith.truncf %10 : vector<8x256xf32> to vector<8x256xbf16>
    %c0_4 = arith.constant 0 : index
    %c0_5 = arith.constant 0 : index
    %15 = vector.load %arg12[%c0_4, %c0_5] : memref<24x256xbf16, #tpu.memory_space<vmem>>, vector<8x256xbf16>
    tpu.vector_store %arg12[%c0_4, %c0_5], %14 {strides = array<i32>} : memref<24x256xbf16, #tpu.memory_space<vmem>>, vector<8x256xbf16>,
    %16 = arith.truncf %6 : vector<8x256xf32> to vector<8x256xbf16>
    %c8 = arith.constant 8 : index
    %c0_6 = arith.constant 0 : index
    %17 = vector.load %arg12[%c8, %c0_6] : memref<24x256xbf16, #tpu.memory_space<vmem>>, vector<8x256xbf16>
    tpu.vector_store %arg12[%c8, %c0_6], %16 {strides = array<i32>} : memref<24x256xbf16, #tpu.memory_space<vmem>>, vector<8x256xbf16>,
    %18 = arith.truncf %13 : vector<8x256xf32> to vector<8x256xbf16>
    %c16 = arith.constant 16 : index
    %c0_7 = arith.constant 0 : index
    %19 = vector.load %arg12[%c16, %c0_7] : memref<24x256xbf16, #tpu.memory_space<vmem>>, vector<8x256xbf16>
    tpu.vector_store %arg12[%c16, %c0_7], %18 {strides = array<i32>} : memref<24x256xbf16, #tpu.memory_space<vmem>>, vector<8x256xbf16>,
    %c0_8 = arith.constant 0 : index
    %c0_9 = arith.constant 0 : index
    %20 = vector.load %arg12[%c0_8, %c0_9] : memref<24x256xbf16, #tpu.memory_space<vmem>>, vector<24x256xbf16>
    %c0_10 = arith.constant 0 : index
    %c0_11 = arith.constant 0 : index
    %c0_12 = arith.constant 0 : index
    %21 = vector.load %arg3[%c0_10, %c0_11, %c0_12] : memref<3x8x24xbf16, #tpu.memory_space<vmem>>, vector<3x8x24xbf16>
    %22 = vector.extract_strided_slice %21 {offsets = [0, 0, 0], sizes = [1, 8, 24], strides = [1, 1, 1]} : vector<3x8x24xbf16> to vector<1x8x24xbf16>
    %23 = vector.shape_cast %22 : vector<1x8x24xbf16> to vector<8x24xbf16>
    %cst = arith.constant dense<0.000000e+00> : vector<8x256xf32>
    %24 = tpu.matmul %23, %20, %cst {dimension_numbers = #tpu.dot_dimension_numbers<[1], [0], [0], [1], [0, 0, 1, 1], [], []>} : vector<8x24xbf16>, vector<24x256xbf16>, vector<8x256xf32> -> vector<8x256xf32>
    %25 = vector.extract_strided_slice %21 {offsets = [1, 0, 0], sizes = [1, 8, 24], strides = [1, 1, 1]} : vector<3x8x24xbf16> to vector<1x8x24xbf16>
    %26 = vector.shape_cast %25 : vector<1x8x24xbf16> to vector<8x24xbf16>
    %cst_13 = arith.constant dense<0.000000e+00> : vector<8x256xf32>
    %27 = tpu.matmul %26, %20, %cst_13 {dimension_numbers = #tpu.dot_dimension_numbers<[1], [0], [0], [1], [0, 0, 1, 1], [], []>} : vector<8x24xbf16>, vector<24x256xbf16>, vector<8x256xf32> -> vector<8x256xf32>
    %28 = vector.extract_strided_slice %21 {offsets = [2, 0, 0], sizes = [1, 8, 24], strides = [1, 1, 1]} : vector<3x8x24xbf16> to vector<1x8x24xbf16>
    %29 = vector.shape_cast %28 : vector<1x8x24xbf16> to vector<8x24xbf16>
    %cst_14 = arith.constant dense<0.000000e+00> : vector<8x256xf32>
    %30 = tpu.matmul %29, %20, %cst_14 {dimension_numbers = #tpu.dot_dimension_numbers<[1], [0], [0], [1], [0, 0, 1, 1], [], []>} : vector<8x24xbf16>, vector<24x256xbf16>, vector<8x256xf32> -> vector<8x256xf32>
    %c16_i32 = arith.constant 16 : i32
    %31 = tpu.dynamic_rotate %24 by %c16_i32 dim 1 : vector<8x256xf32>, i32 -> vector<8x256xf32>
    %32 = vector.broadcast %3 : vector<1x256xf32> to vector<8x256xf32>
    %33 = arith.mulf %31, %32 : vector<8x256xf32>
    %34 = arith.addf %27, %33 : vector<8x256xf32>
    %c240_i32 = arith.constant 240 : i32
    %35 = tpu.dynamic_rotate %30 by %c240_i32 dim 1 : vector<8x256xf32>, i32 -> vector<8x256xf32>
    %36 = vector.broadcast %4 : vector<1x256xf32> to vector<8x256xf32>
    %37 = arith.mulf %35, %36 : vector<8x256xf32>
    %38 = arith.addf %34, %37 : vector<8x256xf32>
    %c0_15 = arith.constant 0 : index
    %c0_16 = arith.constant 0 : index
    %39 = vector.load %arg4[%c0_15, %c0_16] : memref<8x1xf32, #tpu.memory_space<vmem>>, vector<8x1xf32>
    %40 = vector.broadcast %39 : vector<8x1xf32> to vector<8x256xf32>
    %41 = arith.addf %38, %40 : vector<8x256xf32>
    %cst_17 = arith.constant 0.000000e+00 : f32
    %42 = vector.broadcast %cst_17 : f32 to vector<8x256xf32>
    %43 = arith.maximumf %41, %42 : vector<8x256xf32>
    %c1_i32_18 = arith.constant 1 : i32
    %44 = tpu.dynamic_rotate %43 by %c1_i32_18 dim 1 : vector<8x256xf32>, i32 -> vector<8x256xf32>
    %45 = vector.broadcast %1 : vector<1x256xf32> to vector<8x256xf32>
    %46 = arith.mulf %44, %45 : vector<8x256xf32>
    %c255_i32_19 = arith.constant 255 : i32
    %47 = tpu.dynamic_rotate %43 by %c255_i32_19 dim 1 : vector<8x256xf32>, i32 -> vector<8x256xf32>
    %48 = vector.broadcast %2 : vector<1x256xf32> to vector<8x256xf32>
    %49 = arith.mulf %47, %48 : vector<8x256xf32>
    %50 = arith.truncf %46 : vector<8x256xf32> to vector<8x256xbf16>
    %c0_20 = arith.constant 0 : index
    %c0_21 = arith.constant 0 : index
    %51 = vector.load %arg12[%c0_20, %c0_21] : memref<24x256xbf16, #tpu.memory_space<vmem>>, vector<8x256xbf16>
    tpu.vector_store %arg12[%c0_20, %c0_21], %50 {strides = array<i32>} : memref<24x256xbf16, #tpu.memory_space<vmem>>, vector<8x256xbf16>,
    %52 = arith.truncf %43 : vector<8x256xf32> to vector<8x256xbf16>
    %c8_22 = arith.constant 8 : index
    %c0_23 = arith.constant 0 : index
    %53 = vector.load %arg12[%c8_22, %c0_23] : memref<24x256xbf16, #tpu.memory_space<vmem>>, vector<8x256xbf16>
    tpu.vector_store %arg12[%c8_22, %c0_23], %52 {strides = array<i32>} : memref<24x256xbf16, #tpu.memory_space<vmem>>, vector<8x256xbf16>,
    %54 = arith.truncf %49 : vector<8x256xf32> to vector<8x256xbf16>
    %c16_24 = arith.constant 16 : index
    %c0_25 = arith.constant 0 : index
    %55 = vector.load %arg12[%c16_24, %c0_25] : memref<24x256xbf16, #tpu.memory_space<vmem>>, vector<8x256xbf16>
    tpu.vector_store %arg12[%c16_24, %c0_25], %54 {strides = array<i32>} : memref<24x256xbf16, #tpu.memory_space<vmem>>, vector<8x256xbf16>,
    %c0_26 = arith.constant 0 : index
    %c0_27 = arith.constant 0 : index
    %56 = vector.load %arg12[%c0_26, %c0_27] : memref<24x256xbf16, #tpu.memory_space<vmem>>, vector<24x256xbf16>
    %c0_28 = arith.constant 0 : index
    %c0_29 = arith.constant 0 : index
    %c0_30 = arith.constant 0 : index
    %57 = vector.load %arg5[%c0_28, %c0_29, %c0_30] : memref<3x8x24xbf16, #tpu.memory_space<vmem>>, vector<3x8x24xbf16>
    %58 = vector.extract_strided_slice %57 {offsets = [0, 0, 0], sizes = [1, 8, 24], strides = [1, 1, 1]} : vector<3x8x24xbf16> to vector<1x8x24xbf16>
    %59 = vector.shape_cast %58 : vector<1x8x24xbf16> to vector<8x24xbf16>
    %cst_31 = arith.constant dense<0.000000e+00> : vector<8x256xf32>
    %60 = tpu.matmul %59, %56, %cst_31 {dimension_numbers = #tpu.dot_dimension_numbers<[1], [0], [0], [1], [0, 0, 1, 1], [], []>} : vector<8x24xbf16>, vector<24x256xbf16>, vector<8x256xf32> -> vector<8x256xf32>
    %61 = vector.extract_strided_slice %57 {offsets = [1, 0, 0], sizes = [1, 8, 24], strides = [1, 1, 1]} : vector<3x8x24xbf16> to vector<1x8x24xbf16>
    %62 = vector.shape_cast %61 : vector<1x8x24xbf16> to vector<8x24xbf16>
    %cst_32 = arith.constant dense<0.000000e+00> : vector<8x256xf32>
    %63 = tpu.matmul %62, %56, %cst_32 {dimension_numbers = #tpu.dot_dimension_numbers<[1], [0], [0], [1], [0, 0, 1, 1], [], []>} : vector<8x24xbf16>, vector<24x256xbf16>, vector<8x256xf32> -> vector<8x256xf32>
    %64 = vector.extract_strided_slice %57 {offsets = [2, 0, 0], sizes = [1, 8, 24], strides = [1, 1, 1]} : vector<3x8x24xbf16> to vector<1x8x24xbf16>
    %65 = vector.shape_cast %64 : vector<1x8x24xbf16> to vector<8x24xbf16>
    %cst_33 = arith.constant dense<0.000000e+00> : vector<8x256xf32>
    %66 = tpu.matmul %65, %56, %cst_33 {dimension_numbers = #tpu.dot_dimension_numbers<[1], [0], [0], [1], [0, 0, 1, 1], [], []>} : vector<8x24xbf16>, vector<24x256xbf16>, vector<8x256xf32> -> vector<8x256xf32>
    %c16_i32_34 = arith.constant 16 : i32
    %67 = tpu.dynamic_rotate %60 by %c16_i32_34 dim 1 : vector<8x256xf32>, i32 -> vector<8x256xf32>
    %68 = vector.broadcast %3 : vector<1x256xf32> to vector<8x256xf32>
    %69 = arith.mulf %67, %68 : vector<8x256xf32>
    %70 = arith.addf %63, %69 : vector<8x256xf32>
    %c240_i32_35 = arith.constant 240 : i32
    %71 = tpu.dynamic_rotate %66 by %c240_i32_35 dim 1 : vector<8x256xf32>, i32 -> vector<8x256xf32>
    %72 = vector.broadcast %4 : vector<1x256xf32> to vector<8x256xf32>
    %73 = arith.mulf %71, %72 : vector<8x256xf32>
    %74 = arith.addf %70, %73 : vector<8x256xf32>
    %c0_36 = arith.constant 0 : index
    %c0_37 = arith.constant 0 : index
    %75 = vector.load %arg6[%c0_36, %c0_37] : memref<8x1xf32, #tpu.memory_space<vmem>>, vector<8x1xf32>
    %76 = vector.broadcast %75 : vector<8x1xf32> to vector<8x256xf32>
    %77 = arith.addf %74, %76 : vector<8x256xf32>
    %cst_38 = arith.constant 0.000000e+00 : f32
    %78 = vector.broadcast %cst_38 : f32 to vector<8x256xf32>
    %79 = arith.maximumf %77, %78 : vector<8x256xf32>
    %c1_i32_39 = arith.constant 1 : i32
    %80 = tpu.dynamic_rotate %79 by %c1_i32_39 dim 1 : vector<8x256xf32>, i32 -> vector<8x256xf32>
    %81 = vector.broadcast %1 : vector<1x256xf32> to vector<8x256xf32>
    %82 = arith.mulf %80, %81 : vector<8x256xf32>
    %c255_i32_40 = arith.constant 255 : i32
    %83 = tpu.dynamic_rotate %79 by %c255_i32_40 dim 1 : vector<8x256xf32>, i32 -> vector<8x256xf32>
    %84 = vector.broadcast %2 : vector<1x256xf32> to vector<8x256xf32>
    %85 = arith.mulf %83, %84 : vector<8x256xf32>
    %86 = arith.truncf %82 : vector<8x256xf32> to vector<8x256xbf16>
    %c0_41 = arith.constant 0 : index
    %c0_42 = arith.constant 0 : index
    %87 = vector.load %arg12[%c0_41, %c0_42] : memref<24x256xbf16, #tpu.memory_space<vmem>>, vector<8x256xbf16>
    tpu.vector_store %arg12[%c0_41, %c0_42], %86 {strides = array<i32>} : memref<24x256xbf16, #tpu.memory_space<vmem>>, vector<8x256xbf16>,
    %88 = arith.truncf %79 : vector<8x256xf32> to vector<8x256xbf16>
    %c8_43 = arith.constant 8 : index
    %c0_44 = arith.constant 0 : index
    %89 = vector.load %arg12[%c8_43, %c0_44] : memref<24x256xbf16, #tpu.memory_space<vmem>>, vector<8x256xbf16>
    tpu.vector_store %arg12[%c8_43, %c0_44], %88 {strides = array<i32>} : memref<24x256xbf16, #tpu.memory_space<vmem>>, vector<8x256xbf16>,
    %90 = arith.truncf %85 : vector<8x256xf32> to vector<8x256xbf16>
    %c16_45 = arith.constant 16 : index
    %c0_46 = arith.constant 0 : index
    %91 = vector.load %arg12[%c16_45, %c0_46] : memref<24x256xbf16, #tpu.memory_space<vmem>>, vector<8x256xbf16>
    tpu.vector_store %arg12[%c16_45, %c0_46], %90 {strides = array<i32>} : memref<24x256xbf16, #tpu.memory_space<vmem>>, vector<8x256xbf16>,
    %c0_47 = arith.constant 0 : index
    %c0_48 = arith.constant 0 : index
    %92 = vector.load %arg12[%c0_47, %c0_48] : memref<24x256xbf16, #tpu.memory_space<vmem>>, vector<24x256xbf16>
    %c0_49 = arith.constant 0 : index
    %c0_50 = arith.constant 0 : index
    %c0_51 = arith.constant 0 : index
    %93 = vector.load %arg7[%c0_49, %c0_50, %c0_51] : memref<3x8x24xbf16, #tpu.memory_space<vmem>>, vector<3x8x24xbf16>
    %94 = vector.extract_strided_slice %93 {offsets = [0, 0, 0], sizes = [1, 8, 24], strides = [1, 1, 1]} : vector<3x8x24xbf16> to vector<1x8x24xbf16>
    %95 = vector.shape_cast %94 : vector<1x8x24xbf16> to vector<8x24xbf16>
    %cst_52 = arith.constant dense<0.000000e+00> : vector<8x256xf32>
    %96 = tpu.matmul %95, %92, %cst_52 {dimension_numbers = #tpu.dot_dimension_numbers<[1], [0], [0], [1], [0, 0, 1, 1], [], []>} : vector<8x24xbf16>, vector<24x256xbf16>, vector<8x256xf32> -> vector<8x256xf32>
    %97 = vector.extract_strided_slice %93 {offsets = [1, 0, 0], sizes = [1, 8, 24], strides = [1, 1, 1]} : vector<3x8x24xbf16> to vector<1x8x24xbf16>
    %98 = vector.shape_cast %97 : vector<1x8x24xbf16> to vector<8x24xbf16>
    %cst_53 = arith.constant dense<0.000000e+00> : vector<8x256xf32>
    %99 = tpu.matmul %98, %92, %cst_53 {dimension_numbers = #tpu.dot_dimension_numbers<[1], [0], [0], [1], [0, 0, 1, 1], [], []>} : vector<8x24xbf16>, vector<24x256xbf16>, vector<8x256xf32> -> vector<8x256xf32>
    %100 = vector.extract_strided_slice %93 {offsets = [2, 0, 0], sizes = [1, 8, 24], strides = [1, 1, 1]} : vector<3x8x24xbf16> to vector<1x8x24xbf16>
    %101 = vector.shape_cast %100 : vector<1x8x24xbf16> to vector<8x24xbf16>
    %cst_54 = arith.constant dense<0.000000e+00> : vector<8x256xf32>
    %102 = tpu.matmul %101, %92, %cst_54 {dimension_numbers = #tpu.dot_dimension_numbers<[1], [0], [0], [1], [0, 0, 1, 1], [], []>} : vector<8x24xbf16>, vector<24x256xbf16>, vector<8x256xf32> -> vector<8x256xf32>
    %c16_i32_55 = arith.constant 16 : i32
    %103 = tpu.dynamic_rotate %96 by %c16_i32_55 dim 1 : vector<8x256xf32>, i32 -> vector<8x256xf32>
    %104 = vector.broadcast %3 : vector<1x256xf32> to vector<8x256xf32>
    %105 = arith.mulf %103, %104 : vector<8x256xf32>
    %106 = arith.addf %99, %105 : vector<8x256xf32>
    %c240_i32_56 = arith.constant 240 : i32
    %107 = tpu.dynamic_rotate %102 by %c240_i32_56 dim 1 : vector<8x256xf32>, i32 -> vector<8x256xf32>
    %108 = vector.broadcast %4 : vector<1x256xf32> to vector<8x256xf32>
    %109 = arith.mulf %107, %108 : vector<8x256xf32>
    %110 = arith.addf %106, %109 : vector<8x256xf32>
    %c0_57 = arith.constant 0 : index
    %c0_58 = arith.constant 0 : index
    %111 = vector.load %arg8[%c0_57, %c0_58] : memref<8x1xf32, #tpu.memory_space<vmem>>, vector<8x1xf32>
    %112 = vector.broadcast %111 : vector<8x1xf32> to vector<8x256xf32>
    %113 = arith.addf %110, %112 : vector<8x256xf32>
    %cst_59 = arith.constant 0.000000e+00 : f32
    %114 = vector.broadcast %cst_59 : f32 to vector<8x256xf32>
    %115 = arith.maximumf %113, %114 : vector<8x256xf32>
    %c1_i32_60 = arith.constant 1 : i32
    %116 = tpu.dynamic_rotate %115 by %c1_i32_60 dim 1 : vector<8x256xf32>, i32 -> vector<8x256xf32>
    %117 = vector.broadcast %1 : vector<1x256xf32> to vector<8x256xf32>
    %118 = arith.mulf %116, %117 : vector<8x256xf32>
    %c255_i32_61 = arith.constant 255 : i32
    %119 = tpu.dynamic_rotate %115 by %c255_i32_61 dim 1 : vector<8x256xf32>, i32 -> vector<8x256xf32>
    %120 = vector.broadcast %2 : vector<1x256xf32> to vector<8x256xf32>
    %121 = arith.mulf %119, %120 : vector<8x256xf32>
    %122 = arith.truncf %118 : vector<8x256xf32> to vector<8x256xbf16>
    %c0_62 = arith.constant 0 : index
    %c0_63 = arith.constant 0 : index
    %123 = vector.load %arg12[%c0_62, %c0_63] : memref<24x256xbf16, #tpu.memory_space<vmem>>, vector<8x256xbf16>
    tpu.vector_store %arg12[%c0_62, %c0_63], %122 {strides = array<i32>} : memref<24x256xbf16, #tpu.memory_space<vmem>>, vector<8x256xbf16>,
    %124 = arith.truncf %115 : vector<8x256xf32> to vector<8x256xbf16>
    %c8_64 = arith.constant 8 : index
    %c0_65 = arith.constant 0 : index
    %125 = vector.load %arg12[%c8_64, %c0_65] : memref<24x256xbf16, #tpu.memory_space<vmem>>, vector<8x256xbf16>
    tpu.vector_store %arg12[%c8_64, %c0_65], %124 {strides = array<i32>} : memref<24x256xbf16, #tpu.memory_space<vmem>>, vector<8x256xbf16>,
    %126 = arith.truncf %121 : vector<8x256xf32> to vector<8x256xbf16>
    %c16_66 = arith.constant 16 : index
    %c0_67 = arith.constant 0 : index
    %127 = vector.load %arg12[%c16_66, %c0_67] : memref<24x256xbf16, #tpu.memory_space<vmem>>, vector<8x256xbf16>
    tpu.vector_store %arg12[%c16_66, %c0_67], %126 {strides = array<i32>} : memref<24x256xbf16, #tpu.memory_space<vmem>>, vector<8x256xbf16>,
    %c0_68 = arith.constant 0 : index
    %c0_69 = arith.constant 0 : index
    %128 = vector.load %arg12[%c0_68, %c0_69] : memref<24x256xbf16, #tpu.memory_space<vmem>>, vector<24x256xbf16>
    %c0_70 = arith.constant 0 : index
    %c0_71 = arith.constant 0 : index
    %c0_72 = arith.constant 0 : index
    %129 = vector.load %arg9[%c0_70, %c0_71, %c0_72] : memref<3x1x24xbf16, #tpu.memory_space<vmem>>, vector<3x1x24xbf16>
    %130 = vector.extract_strided_slice %129 {offsets = [0, 0, 0], sizes = [1, 1, 24], strides = [1, 1, 1]} : vector<3x1x24xbf16> to vector<1x1x24xbf16>
    %131 = vector.shape_cast %130 : vector<1x1x24xbf16> to vector<1x24xbf16>
    %cst_73 = arith.constant dense<0.000000e+00> : vector<1x256xf32>
    %132 = tpu.matmul %131, %128, %cst_73 {dimension_numbers = #tpu.dot_dimension_numbers<[1], [0], [0], [1], [0, 0, 1, 1], [], []>} : vector<1x24xbf16>, vector<24x256xbf16>, vector<1x256xf32> -> vector<1x256xf32>
    %133 = vector.extract_strided_slice %129 {offsets = [1, 0, 0], sizes = [1, 1, 24], strides = [1, 1, 1]} : vector<3x1x24xbf16> to vector<1x1x24xbf16>
    %134 = vector.shape_cast %133 : vector<1x1x24xbf16> to vector<1x24xbf16>
    %cst_74 = arith.constant dense<0.000000e+00> : vector<1x256xf32>
    %135 = tpu.matmul %134, %128, %cst_74 {dimension_numbers = #tpu.dot_dimension_numbers<[1], [0], [0], [1], [0, 0, 1, 1], [], []>} : vector<1x24xbf16>, vector<24x256xbf16>, vector<1x256xf32> -> vector<1x256xf32>
    %136 = vector.extract_strided_slice %129 {offsets = [2, 0, 0], sizes = [1, 1, 24], strides = [1, 1, 1]} : vector<3x1x24xbf16> to vector<1x1x24xbf16>
    %137 = vector.shape_cast %136 : vector<1x1x24xbf16> to vector<1x24xbf16>
    %cst_75 = arith.constant dense<0.000000e+00> : vector<1x256xf32>
    %138 = tpu.matmul %137, %128, %cst_75 {dimension_numbers = #tpu.dot_dimension_numbers<[1], [0], [0], [1], [0, 0, 1, 1], [], []>} : vector<1x24xbf16>, vector<24x256xbf16>, vector<1x256xf32> -> vector<1x256xf32>
    %c16_i32_76 = arith.constant 16 : i32
    %139 = tpu.dynamic_rotate %132 by %c16_i32_76 dim 1 : vector<1x256xf32>, i32 -> vector<1x256xf32>
    %140 = arith.mulf %139, %3 : vector<1x256xf32>
    %141 = arith.addf %135, %140 : vector<1x256xf32>
    %c240_i32_77 = arith.constant 240 : i32
    %142 = tpu.dynamic_rotate %138 by %c240_i32_77 dim 1 : vector<1x256xf32>, i32 -> vector<1x256xf32>
    %143 = arith.mulf %142, %4 : vector<1x256xf32>
    %144 = arith.addf %141, %143 : vector<1x256xf32>
    %c0_78 = arith.constant 0 : index
    %c0_79 = arith.constant 0 : index
    %145 = vector.load %arg10[%c0_78, %c0_79] : memref<1x1xf32, #tpu.memory_space<vmem>>, vector<1x1xf32>
    %146 = vector.broadcast %145 : vector<1x1xf32> to vector<1x256xf32>
    %147 = arith.addf %144, %146 : vector<1x256xf32>
    %148 = arith.addf %7, %147 : vector<1x256xf32>
    %c0_80 = arith.constant 0 : index
    %c0_81 = arith.constant 0 : index
    %c0_82 = arith.constant 0 : index
    %149 = vector.load %arg11[%c0_80, %c0_81, %c0_82] : memref<1x1x256xf32, #tpu.memory_space<vmem>>, vector<1x1x256xf32>
    %150 = vector.shape_cast %149 : vector<1x1x256xf32> to vector<1x256xf32>
    %151 = vector.shape_cast %148 : vector<1x256xf32> to vector<1x1x256xf32>
    tpu.vector_store %arg11[%c0_80, %c0_81, %c0_82], %151 {strides = array<i32>} : memref<1x1x256xf32, #tpu.memory_space<vmem>>, vector<1x1x256xf32>,
    return
  }
  func.func @transform_0(%arg0: i32) -> (i32, i32, i32) {
    %c0_i32 = arith.constant 0 : i32
    %c0_i32_0 = arith.constant 0 : i32
    %c0_i32_1 = arith.constant 0 : i32
    return %arg0, %c0_i32, %c0_i32_0 : i32, i32, i32
  }
  func.func @transform_1(%arg0: i32) -> (i32, i32) {
    %c0_i32 = arith.constant 0 : i32
    %c0_i32_0 = arith.constant 0 : i32
    %c0_i32_1 = arith.constant 0 : i32
    return %c0_i32, %c0_i32_0 : i32, i32
  }
  func.func @transform_2(%arg0: i32) -> (i32, i32, i32) {
    %c0_i32 = arith.constant 0 : i32
    %c0_i32_0 = arith.constant 0 : i32
    %c0_i32_1 = arith.constant 0 : i32
    %c0_i32_2 = arith.constant 0 : i32
    return %c0_i32, %c0_i32_0, %c0_i32_1 : i32, i32, i32
  }
  func.func @transform_3(%arg0: i32) -> (i32, i32) {
    %c0_i32 = arith.constant 0 : i32
    %c0_i32_0 = arith.constant 0 : i32
    %c0_i32_1 = arith.constant 0 : i32
    return %c0_i32, %c0_i32_0 : i32, i32
  }
  func.func @transform_4(%arg0: i32) -> (i32, i32, i32) {
    %c0_i32 = arith.constant 0 : i32
    %c0_i32_0 = arith.constant 0 : i32
    %c0_i32_1 = arith.constant 0 : i32
    %c0_i32_2 = arith.constant 0 : i32
    return %c0_i32, %c0_i32_0, %c0_i32_1 : i32, i32, i32
  }
  func.func @transform_5(%arg0: i32) -> (i32, i32) {
    %c0_i32 = arith.constant 0 : i32
    %c0_i32_0 = arith.constant 0 : i32
    %c0_i32_1 = arith.constant 0 : i32
    return %c0_i32, %c0_i32_0 : i32, i32
  }
  func.func @transform_6(%arg0: i32) -> (i32, i32, i32) {
    %c0_i32 = arith.constant 0 : i32
    %c0_i32_0 = arith.constant 0 : i32
    %c0_i32_1 = arith.constant 0 : i32
    %c0_i32_2 = arith.constant 0 : i32
    return %c0_i32, %c0_i32_0, %c0_i32_1 : i32, i32, i32
  }
  func.func @transform_7(%arg0: i32) -> (i32, i32) {
    %c0_i32 = arith.constant 0 : i32
    %c0_i32_0 = arith.constant 0 : i32
    %c0_i32_1 = arith.constant 0 : i32
    return %c0_i32, %c0_i32_0 : i32, i32
  }
  func.func @transform_8(%arg0: i32) -> (i32, i32, i32) {
    %c0_i32 = arith.constant 0 : i32
    %c0_i32_0 = arith.constant 0 : i32
    %c0_i32_1 = arith.constant 0 : i32
    %c0_i32_2 = arith.constant 0 : i32
    return %c0_i32, %c0_i32_0, %c0_i32_1 : i32, i32, i32
  }
  func.func @transform_9(%arg0: i32) -> (i32, i32) {
    %c0_i32 = arith.constant 0 : i32
    %c0_i32_0 = arith.constant 0 : i32
    %c0_i32_1 = arith.constant 0 : i32
    return %c0_i32, %c0_i32_0 : i32, i32
  }
  func.func @transform_10(%arg0: i32) -> (i32, i32, i32) {
    %c0_i32 = arith.constant 0 : i32
    %c0_i32_0 = arith.constant 0 : i32
    %c0_i32_1 = arith.constant 0 : i32
    return %arg0, %c0_i32, %c0_i32_0 : i32, i32, i32
  }
}

</mosaic_0001>

<llo_original>
// kernel: tpu_custom_call.1
$region0: #{tpu_custom_call.1}
  #allocation0 [shape = 'u32[]', space=smem, size = 0x4, offset = 0x4, fixed_abs, tag = 'smem constant byte address 0x4 - core index']
  #allocation1 [shape = 'u32[144,128]{1,0:T(1,128)}', space=vmem, size = 0x12000, scoped, tag = 'internal scratch']
  #allocation2 [shape = 'bf16[24,256]{1,0:T(8,128)(2,1)}', space=vmem, size = 0x3000, scoped, tag = 'scratch operand']
  #allocation3 [shape = 'f32[1,1]{1,0:T(1,128)S(1)}', space=vmem, size = 0x200, scoped, tag = 'scoped memory for tpu_custom_call.1']
  %s0 = inlined_call_operand.vmem [shape: f32[2,8,256], index: 0, kind: input, shape index: {}]
  %s1 = inlined_call_operand.hbm [shape: f32[4,256], index: 1, kind: input, shape index: {}]
  %s2 = inlined_call_operand.hbm [shape: bf16[3,8,24], index: 2, kind: input, shape index: {}]
  %s3 = inlined_call_operand.vmem [shape: f32[8,1], index: 3, kind: input, shape index: {}]
  %s4 = inlined_call_operand.hbm [shape: bf16[3,8,24], index: 4, kind: input, shape index: {}]
  %s5 = inlined_call_operand.vmem [shape: f32[8,1], index: 5, kind: input, shape index: {}]
  %s6 = inlined_call_operand.vmem [shape: bf16[3,8,24], index: 6, kind: input, shape index: {}]
  %s7 = inlined_call_operand.vmem [shape: f32[8,1], index: 7, kind: input, shape index: {}]
  %s8 = inlined_call_operand.vmem [shape: bf16[3,1,24], index: 8, kind: input, shape index: {}]
  %s9 = inlined_call_operand.<no memory space> [shape: f32[1,1], index: 9, kind: input, shape index: {}]
  %s10 = inlined_call_operand.hbm [shape: f32[2,1,256], index: 10, kind: output, shape index: {}]
  %s11 = sld [smem:[#allocation0]]
  $region85: #{tpu_custom_call.1} parent=0
    _
  %s13 = ssub.s32 1, %s11
  %s14 = scalar_select 0, %s13, %s11
  %v15 = vstv %s9
  %16 = vst [vmem:[#allocation3] sm:$0x1] %v15
  $region1: #{tpu_custom_call.1} parent=0
    #allocation4 [shape = 'u8[4096]{0}', space=vmem, size = 0x1000, scoped, tag = 'input window, operand 1, single buffered']
    #allocation5 [shape = 's32[2]{0}', space=sflag, size = 0x8, scoped, tag = 'scoped memory for tpu_custom_call.1']
    #allocation6 [shape = 's32[2]{0}', space=sflag, size = 0x8, scoped, tag = 'scoped memory for tpu_custom_call.1']
    #allocation7 [shape = 'u8[6144]{0}', space=vmem, size = 0x1800, scoped, tag = 'input window, operand 2, single buffered']
    #allocation8 [shape = 's32[1]{0}', space=sflag, size = 0x4, scoped, tag = 'scoped memory for tpu_custom_call.1']
    #allocation9 [shape = 'u8[6144]{0}', space=vmem, size = 0x1800, scoped, tag = 'input window, operand 4, single buffered']
    #allocation10 [shape = 'u8[2048]{0}', space=vmem, size = 0x800, scoped, tag = 'output window, operand 0']
    %17 = vsyncpa [#allocation5], 0
    %18 = vsyncpa [#allocation8], 0
    %19 = vsyncpa [#allocation6], 0
    %s20 = scalar_lea.sflag [#allocation6], 1
    %21 = vsyncpa %s20, 0
    loop: start=0, step=1, limit=4
    $region2: #{tpu_custom_call.1} parent=1 // loop_pre_header
      _
    $region3: #{tpu_custom_call.1} parent=1 // loop_header
      %s23 = sphi 0, %s27
      %p24 = scmp.ge.s32.totalorder %s23, 4
      %s33 = sphi 0, %s35
      %s36 = sphi 0, %s33
      %s37 = sphi 0, %s36
      %s53 = sphi 0, %s37
      %s57 = sphi 0, %s57
      %s59 = sphi 0, %s57
      %s60 = sphi 0, %s59
      %s74 = sphi 0, %s60
      %s78 = sphi 0, %s78
      %s80 = sphi 0, %s78
      %s81 = sphi 0, %s80
      %s95 = sphi 0, %s81
      %s99 = sphi 0, %s99
      %s101 = sphi 0, %s99
      %s102 = sphi 0, %s101
      %s116 = sphi 0, %s102
      %s120 = sphi 0, %s120
      %s122 = sphi 0, %s120
      %s123 = sphi 0, %s122
      %s137 = sphi 0, %s123
      %s141 = sphi 0, %s141
      %s143 = sphi 0, %s141
      %s144 = sphi 0, %s143
      %s158 = sphi 0, %s144
      %s162 = sphi 0, %s162
      %s164 = sphi 0, %s162
      %s165 = sphi 0, %s164
      %s179 = sphi 0, %s165
      %s183 = sphi 0, %s183
      %s185 = sphi 0, %s183
      %s186 = sphi 0, %s185
      %s200 = sphi 0, %s186
      %s204 = sphi 0, %s204
      %s206 = sphi 0, %s204
      %s207 = sphi 0, %s206
      %s221 = sphi 0, %s207
      %s225 = sphi 0, %s225
      %s227 = sphi 0, %s225
      %s228 = sphi 0, %s227
      %s242 = sphi 0, %s228
      %s248 = sphi 0, %s250
      %s251 = sphi 0, %s248
      %s252 = sphi 0, %s251
      %s268 = sphi 0, %s252
    $region4: #{tpu_custom_call.1} parent=1 // loop_header_branch
      %26 = sbr.rel (%p24) target = $region8
    $region5: #{tpu_custom_call.1} parent=1 // loop_body
      %s28 = ssub.s32 %s23, 1
      %s29 = ssub.s32 %s23, 2
      %s30 = sadd.s32 %s23, 1
      %s31 = ssub.s32 %s23, %s30
      %p32 = scmp.eq.s32.totalorder %s31, 0
      %s34 = sadd.s32 %s33, 1
      %s35 = scalar_select %p32, %s33, %s34
      %p38 = pneg %p32
      %p39 = scmp.eq.s32.totalorder %s23, 1
      %p40 = por %p38, %p39
      %p41 = scmp.ne.s32.totalorder %s33, %s36
      %p42 = scmp.eq.s32.totalorder %s23, 0
      %p43 = por %p41, %p42
      %p44 = scmp.ne.s32.totalorder %s33, %s36
      %p45 = scmp.eq.s32.totalorder %s28, 1
      %p46 = por %p44, %p45
      %p47 = scmp.ne.s32.totalorder %s36, %s37
      %p48 = scmp.eq.s32.totalorder %s28, 0
      %p49 = por %p47, %p48
      %p50 = scmp.ne.s32.totalorder %s36, %s37
      %p51 = scmp.eq.s32.totalorder %s29, 1
      %p52 = por %p50, %p51
      %p54 = scmp.ne.s32.totalorder %s37, %s53
      %p55 = scmp.eq.s32.totalorder %s29, 0
      %p56 = por %p54, %p55
      %s58 = sadd.s32 %s57, 1
      %p61 = scmp.eq.s32.totalorder %s23, 1
      %p62 = scmp.ne.s32.totalorder %s57, %s59
      %p63 = scmp.eq.s32.totalorder %s23, 0
      %p64 = por %p62, %p63
      %p65 = scmp.ne.s32.totalorder %s57, %s59
      %p66 = scmp.eq.s32.totalorder %s28, 1
      %p67 = por %p65, %p66
      %p68 = scmp.ne.s32.totalorder %s59, %s60
      %p69 = scmp.eq.s32.totalorder %s28, 0
      %p70 = por %p68, %p69
      %p71 = scmp.ne.s32.totalorder %s59, %s60
      %p72 = scmp.eq.s32.totalorder %s29, 1
      %p73 = por %p71, %p72
      %p75 = scmp.ne.s32.totalorder %s60, %s74
      %p76 = scmp.eq.s32.totalorder %s29, 0
      %p77 = por %p75, %p76
      %s79 = sadd.s32 %s78, 1
      %p82 = scmp.eq.s32.totalorder %s23, 1
      %p83 = scmp.ne.s32.totalorder %s78, %s80
      %p84 = scmp.eq.s32.totalorder %s23, 0
      %p85 = por %p83, %p84
      %p86 = scmp.ne.s32.totalorder %s78, %s80
      %p87 = scmp.eq.s32.totalorder %s28, 1
      %p88 = por %p86, %p87
      %p89 = scmp.ne.s32.totalorder %s80, %s81
      %p90 = scmp.eq.s32.totalorder %s28, 0
      %p91 = por %p89, %p90
      %p92 = scmp.ne.s32.totalorder %s80, %s81
      %p93 = scmp.eq.s32.totalorder %s29, 1
      %p94 = por %p92, %p93
      %p96 = scmp.ne.s32.totalorder %s81, %s95
      %p97 = scmp.eq.s32.totalorder %s29, 0
      %p98 = por %p96, %p97
      %s100 = sadd.s32 %s99, 1
      %p103 = scmp.eq.s32.totalorder %s23, 1
      %p104 = scmp.ne.s32.totalorder %s99, %s101
      %p105 = scmp.eq.s32.totalorder %s23, 0
      %p106 = por %p104, %p105
      %p107 = scmp.ne.s32.totalorder %s99, %s101
      %p108 = scmp.eq.s32.totalorder %s28, 1
      %p109 = por %p107, %p108
      %p110 = scmp.ne.s32.totalorder %s101, %s102
      %p111 = scmp.eq.s32.totalorder %s28, 0
      %p112 = por %p110, %p111
      %p113 = scmp.ne.s32.totalorder %s101, %s102
      %p114 = scmp.eq.s32.totalorder %s29, 1
      %p115 = por %p113, %p114
      %p117 = scmp.ne.s32.totalorder %s102, %s116
      %p118 = scmp.eq.s32.totalorder %s29, 0
      %p119 = por %p117, %p118
      %s121 = sadd.s32 %s120, 1
      %p124 = scmp.eq.s32.totalorder %s23, 1
      %p125 = scmp.ne.s32.totalorder %s120, %s122
      %p126 = scmp.eq.s32.totalorder %s23, 0
      %p127 = por %p125, %p126
      %p128 = scmp.ne.s32.totalorder %s120, %s122
      %p129 = scmp.eq.s32.totalorder %s28, 1
      %p130 = por %p128, %p129
      %p131 = scmp.ne.s32.totalorder %s122, %s123
      %p132 = scmp.eq.s32.totalorder %s28, 0
      %p133 = por %p131, %p132
      %p134 = scmp.ne.s32.totalorder %s122, %s123
      %p135 = scmp.eq.s32.totalorder %s29, 1
      %p136 = por %p134, %p135
      %p138 = scmp.ne.s32.totalorder %s123, %s137
      %p139 = scmp.eq.s32.totalorder %s29, 0
      %p140 = por %p138, %p139
      %s142 = sadd.s32 %s141, 1
      %p145 = scmp.eq.s32.totalorder %s23, 1
      %p146 = scmp.ne.s32.totalorder %s141, %s143
      %p147 = scmp.eq.s32.totalorder %s23, 0
      %p148 = por %p146, %p147
      %p149 = scmp.ne.s32.totalorder %s141, %s143
      %p150 = scmp.eq.s32.totalorder %s28, 1
      %p151 = por %p149, %p150
      %p152 = scmp.ne.s32.totalorder %s143, %s144
      %p153 = scmp.eq.s32.totalorder %s28, 0
      %p154 = por %p152, %p153
      %p155 = scmp.ne.s32.totalorder %s143, %s144
      %p156 = scmp.eq.s32.totalorder %s29, 1
      %p157 = por %p155, %p156
      %p159 = scmp.ne.s32.totalorder %s144, %s158
      %p160 = scmp.eq.s32.totalorder %s29, 0
      %p161 = por %p159, %p160
      %s163 = sadd.s32 %s162, 1
      %p166 = scmp.eq.s32.totalorder %s23, 1
      %p167 = scmp.ne.s32.totalorder %s162, %s164
      %p168 = scmp.eq.s32.totalorder %s23, 0
      %p169 = por %p167, %p168
      %p170 = scmp.ne.s32.totalorder %s162, %s164
      %p171 = scmp.eq.s32.totalorder %s28, 1
      %p172 = por %p170, %p171
      %p173 = scmp.ne.s32.totalorder %s164, %s165
      %p174 = scmp.eq.s32.totalorder %s28, 0
      %p175 = por %p173, %p174
      %p176 = scmp.ne.s32.totalorder %s164, %s165
      %p177 = scmp.eq.s32.totalorder %s29, 1
      %p178 = por %p176, %p177
      %p180 = scmp.ne.s32.totalorder %s165, %s179
      %p181 = scmp.eq.s32.totalorder %s29, 0
      %p182 = por %p180, %p181
      %s184 = sadd.s32 %s183, 1
      %p187 = scmp.eq.s32.totalorder %s23, 1
      %p188 = scmp.ne.s32.totalorder %s183, %s185
      %p189 = scmp.eq.s32.totalorder %s23, 0
      %p190 = por %p188, %p189
      %p191 = scmp.ne.s32.totalorder %s183, %s185
      %p192 = scmp.eq.s32.totalorder %s28, 1
      %p193 = por %p191, %p192
      %p194 = scmp.ne.s32.totalorder %s185, %s186
      %p195 = scmp.eq.s32.totalorder %s28, 0
      %p196 = por %p194, %p195
      %p197 = scmp.ne.s32.totalorder %s185, %s186
      %p198 = scmp.eq.s32.totalorder %s29, 1
      %p199 = por %p197, %p198
      %p201 = scmp.ne.s32.totalorder %s186, %s200
      %p202 = scmp.eq.s32.totalorder %s29, 0
      %p203 = por %p201, %p202
      %s205 = sadd.s32 %s204, 1
      %p208 = scmp.eq.s32.totalorder %s23, 1
      %p209 = scmp.ne.s32.totalorder %s204, %s206
      %p210 = scmp.eq.s32.totalorder %s23, 0
      %p211 = por %p209, %p210
      %p212 = scmp.ne.s32.totalorder %s204, %s206
      %p213 = scmp.eq.s32.totalorder %s28, 1
      %p214 = por %p212, %p213
      %p215 = scmp.ne.s32.totalorder %s206, %s207
      %p216 = scmp.eq.s32.totalorder %s28, 0
      %p217 = por %p215, %p216
      %p218 = scmp.ne.s32.totalorder %s206, %s207
      %p219 = scmp.eq.s32.totalorder %s29, 1
      %p220 = por %p218, %p219
      %p222 = scmp.ne.s32.totalorder %s207, %s221
      %p223 = scmp.eq.s32.totalorder %s29, 0
      %p224 = por %p222, %p223
      %s226 = sadd.s32 %s225, 1
      %p229 = scmp.eq.s32.totalorder %s23, 1
      %p230 = scmp.ne.s32.totalorder %s225, %s227
      %p231 = scmp.eq.s32.totalorder %s23, 0
      %p232 = por %p230, %p231
      %p233 = scmp.ne.s32.totalorder %s225, %s227
      %p234 = scmp.eq.s32.totalorder %s28, 1
      %p235 = por %p233, %p234
      %p236 = scmp.ne.s32.totalorder %s227, %s228
      %p237 = scmp.eq.s32.totalorder %s28, 0
      %p238 = por %p236, %p237
      %p239 = scmp.ne.s32.totalorder %s227, %s228
      %p240 = scmp.eq.s32.totalorder %s29, 1
      %p241 = por %p239, %p240
      %p243 = scmp.ne.s32.totalorder %s228, %s242
      %p244 = scmp.eq.s32.totalorder %s29, 0
      %p245 = por %p243, %p244
      %s246 = ssub.s32 %s23, %s30
      %p247 = scmp.eq.s32.totalorder %s246, 0
      %s249 = sadd.s32 %s248, 1
      %s250 = scalar_select %p247, %s248, %s249
      %p253 = pneg %p247
      %p254 = scmp.eq.s32.totalorder %s23, 1
      %p255 = por %p253, %p254
      %p256 = scmp.ne.s32.totalorder %s248, %s251
      %p257 = scmp.eq.s32.totalorder %s23, 0
      %p258 = por %p256, %p257
      %p259 = scmp.ne.s32.totalorder %s248, %s251
      %p260 = scmp.eq.s32.totalorder %s28, 1
      %p261 = por %p259, %p260
      %p262 = scmp.ne.s32.totalorder %s251, %s252
      %p263 = scmp.eq.s32.totalorder %s28, 0
      %p264 = por %p262, %p263
      %p265 = scmp.ne.s32.totalorder %s251, %s252
      %p266 = scmp.eq.s32.totalorder %s29, 1
      %p267 = por %p265, %p266
      %p269 = scmp.ne.s32.totalorder %s252, %s268
      %p270 = scmp.eq.s32.totalorder %s29, 0
      %p271 = por %p269, %p270
      %p272 = scmp.le.s32.totalorder 1, %s23
      %p273 = scmp.lt.s32.totalorder %s23, 3
      %p274 = pnand %p272, %p273
      %p275 = pneg %p274
      // Predicated region
      $region9: #{tpu_custom_call.1} parent=5 // pred_check
        _
      $region10: #{tpu_custom_call.1} parent=5 // pred_check_branch
        %277 = sbr.rel (%p274) target = $region12
      $region11: #{tpu_custom_call.1} parent=5 // pred_region
        %s278 = ssub.s32 %s23, 1
        // Predicated region
        $region13: #{tpu_custom_call.1} parent=11 // pred_check
          %p279 = pneg %p70
        $region14: #{tpu_custom_call.1} parent=11 // pred_check_branch
          %281 = sbr.rel (%p279) target = $region16
        $region15: #{tpu_custom_call.1} parent=11 // pred_region
          %s283 = ssub.s32 128, 128
          %284 = vsyncadd [#allocation5], %s283
          %s286 = sshll.u32 [#allocation4], 4
          %s287 = int_to_ptr.vmem [resolvable:$true] %s286
          %289 = dma.hbm_to_vmem [thread:$0]  %s1, 128, %s287, [#allocation5]
        $region16: #{tpu_custom_call.1} parent=11 // pred_fallthru
          _
        // Predicated region
        $region17: #{tpu_custom_call.1} parent=11 // pred_check
          %p290 = pneg %p91
        $region18: #{tpu_custom_call.1} parent=11 // pred_check_branch
          %292 = sbr.rel (%p290) target = $region20
        $region19: #{tpu_custom_call.1} parent=11 // pred_region
          %s294 = ssub.s32 192, 192
          %295 = vsyncadd [#allocation8], %s294
          %s296 = sshll.u32 [#allocation7], 4
          %s297 = int_to_ptr.vmem [resolvable:$true] %s296
          %302 = dma.hbm_to_vmem [thread:$0]  %s2, 192, %s297, [#allocation8], 64, 64, 4
        $region20: #{tpu_custom_call.1} parent=11 // pred_fallthru
          _
        // Predicated region
        $region21: #{tpu_custom_call.1} parent=11 // pred_check
          %p303 = pneg %p112
        $region22: #{tpu_custom_call.1} parent=11 // pred_check_branch
          %305 = sbr.rel (%p303) target = $region24
        $region23: #{tpu_custom_call.1} parent=11 // pred_region
          _
        $region24: #{tpu_custom_call.1} parent=11 // pred_fallthru
          _
        // Predicated region
        $region25: #{tpu_custom_call.1} parent=11 // pred_check
          %p306 = pneg %p133
        $region26: #{tpu_custom_call.1} parent=11 // pred_check_branch
          %308 = sbr.rel (%p306) target = $region28
        $region27: #{tpu_custom_call.1} parent=11 // pred_region
          %s310 = ssub.s32 192, 192
          %311 = vsyncadd [#allocation8], %s310
          %s312 = sshll.u32 [#allocation9], 4
          %s313 = int_to_ptr.vmem [resolvable:$true] %s312
          %318 = dma.hbm_to_vmem [thread:$0]  %s4, 192, %s313, [#allocation8], 64, 64, 4
        $region28: #{tpu_custom_call.1} parent=11 // pred_fallthru
          _
        // Predicated region
        $region29: #{tpu_custom_call.1} parent=11 // pred_check
          %p319 = pneg %p154
        $region30: #{tpu_custom_call.1} parent=11 // pred_check_branch
          %321 = sbr.rel (%p319) target = $region32
        $region31: #{tpu_custom_call.1} parent=11 // pred_region
          _
        $region32: #{tpu_custom_call.1} parent=11 // pred_fallthru
          _
        // Predicated region
        $region33: #{tpu_custom_call.1} parent=11 // pred_check
          %p322 = pneg %p175
        $region34: #{tpu_custom_call.1} parent=11 // pred_check_branch
          %324 = sbr.rel (%p322) target = $region36
        $region35: #{tpu_custom_call.1} parent=11 // pred_region
          _
        $region36: #{tpu_custom_call.1} parent=11 // pred_fallthru
          _
        // Predicated region
        $region37: #{tpu_custom_call.1} parent=11 // pred_check
          %p325 = pneg %p196
        $region38: #{tpu_custom_call.1} parent=11 // pred_check_branch
          %327 = sbr.rel (%p325) target = $region40
        $region39: #{tpu_custom_call.1} parent=11 // pred_region
          _
        $region40: #{tpu_custom_call.1} parent=11 // pred_fallthru
          _
        // Predicated region
        $region41: #{tpu_custom_call.1} parent=11 // pred_check
          %p328 = pneg %p217
        $region42: #{tpu_custom_call.1} parent=11 // pred_check_branch
          %330 = sbr.rel (%p328) target = $region44
        $region43: #{tpu_custom_call.1} parent=11 // pred_region
          _
        $region44: #{tpu_custom_call.1} parent=11 // pred_fallthru
          _
        // Predicated region
        $region45: #{tpu_custom_call.1} parent=11 // pred_check
          %p331 = pneg %p238
        $region46: #{tpu_custom_call.1} parent=11 // pred_check_branch
          %333 = sbr.rel (%p331) target = $region48
        $region47: #{tpu_custom_call.1} parent=11 // pred_region
          _
        $region48: #{tpu_custom_call.1} parent=11 // pred_fallthru
          _
      $region12: #{tpu_custom_call.1} parent=5 // pred_fallthru
        _
      %p334 = scmp.lt.s32.totalorder %s23, 2
      // Predicated region
      $region49: #{tpu_custom_call.1} parent=5 // pred_check
        %p335 = pneg %p334
      $region50: #{tpu_custom_call.1} parent=5 // pred_check_branch
        %337 = sbr.rel (%p335) target = $region52
      $region51: #{tpu_custom_call.1} parent=5 // pred_region
        // Predicated region
        $region53: #{tpu_custom_call.1} parent=51 // pred_check
          %p338 = pneg %p43
        $region54: #{tpu_custom_call.1} parent=51 // pred_check_branch
          %340 = sbr.rel (%p338) target = $region56
        $region55: #{tpu_custom_call.1} parent=51 // pred_region
          %p341 = scmp.lt.s32.totalorder %s23, 1
          %s342 = scalar_select %p341, %s23, 1
          %s343 = smul.addr %s342, 2
          %s344 = smul.addr %s343, 8
          %s345 = scalar_lea.vmem %s0, %s344
        $region56: #{tpu_custom_call.1} parent=51 // pred_fallthru
          _
      $region52: #{tpu_custom_call.1} parent=5 // pred_fallthru
        _
      %p346 = scmp.le.s32.totalorder 1, %s23
      %p347 = scmp.lt.s32.totalorder %s23, 3
      %p348 = pnand %p346, %p347
      %p349 = pneg %p348
      // Predicated region
      $region57: #{tpu_custom_call.1} parent=5 // pred_check
        _
      $region58: #{tpu_custom_call.1} parent=5 // pred_check_branch
        %351 = sbr.rel (%p348) target = $region60
      $region59: #{tpu_custom_call.1} parent=5 // pred_region
        %s352 = ssub.s32 %s23, 1
        // Predicated region
        $region61: #{tpu_custom_call.1} parent=59 // pred_check
          %p353 = pneg %p70
        $region62: #{tpu_custom_call.1} parent=59 // pred_check_branch
          %355 = sbr.rel (%p353) target = $region64
        $region63: #{tpu_custom_call.1} parent=59 // pred_region
          %356 = dma.done [#allocation5], 128
        $region64: #{tpu_custom_call.1} parent=59 // pred_fallthru
          _
        // Predicated region
        $region65: #{tpu_custom_call.1} parent=59 // pred_check
          %p357 = pneg %p91
        $region66: #{tpu_custom_call.1} parent=59 // pred_check_branch
          %359 = sbr.rel (%p357) target = $region68
        $region67: #{tpu_custom_call.1} parent=59 // pred_region
          %360 = dma.done [#allocation8], 192
        $region68: #{tpu_custom_call.1} parent=59 // pred_fallthru
          _
        // Predicated region
        $region69: #{tpu_custom_call.1} parent=59 // pred_check
          %p361 = pneg %p133
        $region70: #{tpu_custom_call.1} parent=59 // pred_check_branch
          %363 = sbr.rel (%p361) target = $region72
        $region71: #{tpu_custom_call.1} parent=59 // pred_region
          %364 = dma.done [#allocation8], 192
        $region72: #{tpu_custom_call.1} parent=59 // pred_fallthru
          _
        %p365 = scmp.lt.s32.totalorder %s28, 1
        %s366 = scalar_select %p365, %s28, 1
        %s367 = smul.addr %s366, 2
        %s368 = smul.addr %s367, 8
        %s369 = scalar_lea.vmem %s0, %s368
        %p370 = pneg %p49
        %p371 = pneg %p46
        %p372 = pneg %p70
        %p373 = pneg %p67
        %p374 = pneg %p91
        %p375 = pneg %p88
        %p376 = pneg %p112
        %p377 = pneg %p109
        %p378 = pneg %p133
        %p379 = pneg %p130
        %p380 = pneg %p154
        %p381 = pneg %p151
        %p382 = pneg %p175
        %p383 = pneg %p172
        %p384 = pneg %p196
        %p385 = pneg %p193
        %p386 = pneg %p217
        %p387 = pneg %p214
        %p388 = pneg %p238
        %p389 = pneg %p235
        %p390 = pneg %p264
        %p391 = pneg %p261
        %s392 = sand.u32 %s251, 1
        %s393 = scalar_lea.sflag [#allocation6], %s392
        %s394 = sand.u32 %s251, 1
        %s395 = smul.addr %s394, 2
        %s396 = scalar_lea.vmem [#allocation10], %s395
        %p397 = scmp.lt.s32.totalorder %s28, 1
        %s398 = scalar_select %p397, %s28, 1
        %s399 = smul.addr %s398, 2
        %s400 = smul.addr %s399, 8
        %s401 = scalar_lea.vmem %s0, %s400
        %v403 = vld [vmem:[#allocation4] sm:$0xff]
        %v404 = vld [vmem:[%s401] sm:$0xff]
        %v405 = vld [vmem:[%s401 + $0x8] sm:$0xff]
        %406 = vrot.lane.b32.xlu0 %v404, 1
        %v407 = vpop.permute.xlu0 %406
        %408 = vrot.lane.b32.xlu0 %v405, 1
        %v409 = vpop.permute.xlu0 %408
        %v410 = vlaneseq
        %v411 = vand.u32 %v410, 127
        %vm412 = vcmp.lt.s32.totalorder %v411, 1
        %v413 = vsel %vm412, %v407, %v409
        %v414 = vsel %vm412, %v409, %v407
        %v416 = vlaneseq
        %v417 = vshrl.u32 %v416, 7
        %v418 = vsub.s32 0, %v417
        %v419 = vrot.slane %v403, %v418
        %v420 = vlaneseq
        %v421 = vshrl.u32 %v420, 7
        %v422 = vsub.s32 4, %v421
        %v423 = vrot.slane %v403, %v422
        %v426 = vlaneseq
        %v427 = vshrl.u32 %v426, 7
        %v428 = vsub.s32 0, %v427
        %v429 = vrot.slane %v419, %v428
        %v430 = vlaneseq
        %v431 = vshrl.u32 %v430, 7
        %v432 = vsub.s32 0, %v431
        %v433 = vrot.slane %v423, %v432
        %v434 = vmul.f32 %v414, %v429
        %v435 = vmul.f32 %v413, %v433
        %436 = vrot.lane.b32.xlu0 %v404, 127
        %v437 = vpop.permute.xlu0 %436
        %438 = vrot.lane.b32.xlu0 %v405, 127
        %v439 = vpop.permute.xlu0 %438
        %vm440 = vcmp.lt.s32.totalorder %v411, 127
        %v441 = vsel %vm440, %v437, %v439
        %v442 = vsel %vm440, %v439, %v437
        %v443 = vlaneseq
        %v444 = vshrl.u32 %v443, 7
        %v445 = vsub.s32 1, %v444
        %v446 = vrot.slane %v403, %v445
        %v447 = vlaneseq
        %v448 = vshrl.u32 %v447, 7
        %v449 = vsub.s32 5, %v448
        %v450 = vrot.slane %v403, %v449
        %v453 = vlaneseq
        %v454 = vshrl.u32 %v453, 7
        %v455 = vsub.s32 1, %v454
        %v456 = vrot.slane %v446, %v455
        %v457 = vlaneseq
        %v458 = vshrl.u32 %v457, 7
        %v459 = vsub.s32 1, %v458
        %v460 = vrot.slane %v450, %v459
        %v461 = vmul.f32 %v441, %v456
        %v462 = vmul.f32 %v442, %v460
        %v463 = vpack.c.bf16 %v434, %v434
        %v464 = vpack.c.bf16 %v435, %v435
        %v467 = vunpack.c.l.b16 %v463
        %v468 = vunpack.c.l.b16 %v464
        %v469 = vpack.c.b16 %v468, %v467
        %471 = vst [vmem:[#allocation2] sm:$0xff] %v469
        %v472 = vpack.c.bf16 %v404, %v404
        %v473 = vpack.c.bf16 %v405, %v405
        %v476 = vunpack.c.l.b16 %v472
        %v477 = vunpack.c.l.b16 %v473
        %v478 = vpack.c.b16 %v477, %v476
        %480 = vst [vmem:[#allocation2 + $0x8] sm:$0xff] %v478
        %v481 = vpack.c.bf16 %v461, %v461
        %v482 = vpack.c.bf16 %v462, %v462
        %v485 = vunpack.c.l.b16 %v481
        %v486 = vunpack.c.l.b16 %v482
        %v487 = vpack.c.b16 %v486, %v485
        %489 = vst [vmem:[#allocation2 + $0x10] sm:$0xff] %v487
        %v490 = vld [vmem:[#allocation2] sm:$0xff]
        %v491 = vld [vmem:[#allocation2 + $0x8] sm:$0xff]
        %v492 = vld [vmem:[#allocation2 + $0x10] sm:$0xff]
        %v493 = vld [vmem:[#allocation7] sm:$0xf]
        %v494 = vld [vmem:[#allocation7 + $0x4] sm:$0xf]
        %v495 = vld [vmem:[#allocation7 + $0x8] sm:$0xf]
        %v499 = vunpack.c.l.b16 %v490
        %v500 = vunpack.c.h.b16 %v490
        %v501 = vunpack.c.l.b16 %v491
        %v502 = vunpack.c.h.b16 %v491
        %v503 = vunpack.c.l.b16 %v492
        %v504 = vunpack.c.h.b16 %v492
        %v505 = vpack.c.b16 %v501, %v499
        %v506 = vpack.c.b16 %v502, %v500
        %v507 = vpack.c.b16 %v503, %v503
        %v508 = vpack.c.b16 %v504, %v504
        %vm511 = vcmask 195584
        %v513 = vsel %vm511, %v493, 0
        %vm515 = vcmask 1043456
        %v517 = vsel %vm515, %v507, 0
        %v520 = vsel %vm515, %v508, 0
        %522 = vmatprep.subr.bf16.mxu0 0
        %523 = vmatpush1.bf16.msra.mxu0 0
        %524 = vmatprep.subr.bf16.mxu0 0
        %525 = vmatpush1.bf16.msra.mxu0 0
        %526 = vmatprep.subr.bf16.mxu0 0
        %527 = vmatpush1.bf16.msra.mxu0 0
        %528 = vmatprep.subr.bf16.mxu0 0
        %529 = vmatpush1.bf16.msra.mxu0 0
        %530 = vmatprep.subr.bf16.mxu0 0
        %531 = vmatpush1.bf16.msra.mxu0 0
        %532 = vmatprep.subr.bf16.mxu0 0
        %533 = vmatpush1.bf16.msra.mxu0 0
        %534 = vmatprep.subr.bf16.mxu0 %v520
        %535 = vmatpush1.bf16.msra.mxu0 %v517
        %536 = vmatprep.subr.bf16.mxu0 %v506
        %537 = vmatpush1.bf16.msra.mxu0 %v505
        %538 = vmatprep.subr.bf16.mxu0 0
        %539 = vmatpush2.bf16.msra.mxu0 0
        %540 = vmatprep.subr.bf16.mxu0 0
        %541 = vmatpush2.bf16.msra.mxu0 0
        %542 = vmatprep.subr.bf16.mxu0 0
        %543 = vmatpush2.bf16.msra.mxu0 0
        %544 = vmatprep.subr.bf16.mxu0 0
        %545 = vmatpush2.bf16.msra.mxu0 0
        %546 = vmatprep.subr.bf16.mxu0 0
        %547 = vmatpush2.bf16.msra.mxu0 0
        %548 = vmatprep.subr.bf16.mxu0 0
        %549 = vmatpush2.bf16.msra.mxu0 0
        %550 = vmatprep.subr.bf16.mxu0 0
        %551 = vmatpush2.bf16.msra.mxu0 0
        %552 = vmatprep.subr.bf16.mxu0 0
        %553 = vmatpush2.bf16.msra.mxu0 0
        %554 = vmatprep.mubr.bf16.mxu0 0
        %555 = vmatmul.mubr.bf16.gmra.mxu0 %v513
        %v556 = vpop.f32.mrf.mxu0
        %v557 = vadd.f32 0.0, %v556
        %v558 = vpop.f32.mrf.mxu0
        %v559 = vadd.f32 0.0, %v558
        %v560 = vpop.f32.mrf.mxu0
        %v561 = vpop.f32.mrf.mxu0
        %562 = vdwg.mxu0
        %v564 = vsel %vm511, %v495, 0
        %566 = vmatprep.subr.bf16.mxu0 0
        %567 = vmatpush1.bf16.msra.mxu0 0
        %568 = vmatprep.subr.bf16.mxu0 0
        %569 = vmatpush1.bf16.msra.mxu0 0
        %570 = vmatprep.subr.bf16.mxu0 0
        %571 = vmatpush1.bf16.msra.mxu0 0
        %572 = vmatprep.subr.bf16.mxu0 0
        %573 = vmatpush1.bf16.msra.mxu0 0
        %574 = vmatprep.subr.bf16.mxu0 0
        %575 = vmatpush1.bf16.msra.mxu0 0
        %576 = vmatprep.subr.bf16.mxu0 0
        %577 = vmatpush1.bf16.msra.mxu0 0
        %578 = vmatprep.subr.bf16.mxu0 %v520
        %579 = vmatpush1.bf16.msra.mxu0 %v517
        %580 = vmatprep.subr.bf16.mxu0 %v506
        %581 = vmatpush1.bf16.msra.mxu0 %v505
        %582 = vmatprep.subr.bf16.mxu0 0
        %583 = vmatpush2.bf16.msra.mxu0 0
        %584 = vmatprep.subr.bf16.mxu0 0
        %585 = vmatpush2.bf16.msra.mxu0 0
        %586 = vmatprep.subr.bf16.mxu0 0
        %587 = vmatpush2.bf16.msra.mxu0 0
        %588 = vmatprep.subr.bf16.mxu0 0
        %589 = vmatpush2.bf16.msra.mxu0 0
        %590 = vmatprep.subr.bf16.mxu0 0
        %591 = vmatpush2.bf16.msra.mxu0 0
        %592 = vmatprep.subr.bf16.mxu0 0
        %593 = vmatpush2.bf16.msra.mxu0 0
        %594 = vmatprep.subr.bf16.mxu0 0
        %595 = vmatpush2.bf16.msra.mxu0 0
        %596 = vmatprep.subr.bf16.mxu0 0
        %597 = vmatpush2.bf16.msra.mxu0 0
        %598 = vmatprep.mubr.bf16.mxu0 0
        %599 = vmatmul.mubr.bf16.gmra.mxu0 %v564
        %v600 = vpop.f32.mrf.mxu0
        %v601 = vadd.f32 0.0, %v600
        %v602 = vpop.f32.mrf.mxu0
        %v603 = vadd.f32 0.0, %v602
        %v604 = vpop.f32.mrf.mxu0
        %v605 = vpop.f32.mrf.mxu0
        %606 = vdwg.mxu0
        %607 = vrot.lane.b32.xlu0 %v557, 16
        %v608 = vpop.permute.xlu0 %607
        %609 = vrot.lane.b32.xlu0 %v559, 16
        %v610 = vpop.permute.xlu0 %609
        %vm611 = vcmp.lt.s32.totalorder %v411, 16
        %v612 = vsel %vm611, %v608, %v610
        %v613 = vsel %vm611, %v610, %v608
        %v614 = vlaneseq
        %v615 = vshrl.u32 %v614, 7
        %v616 = vsub.s32 2, %v615
        %v617 = vrot.slane %v403, %v616
        %v618 = vlaneseq
        %v619 = vshrl.u32 %v618, 7
        %v620 = vsub.s32 6, %v619
        %v621 = vrot.slane %v403, %v620
        %v624 = vlaneseq
        %v625 = vshrl.u32 %v624, 7
        %v626 = vsub.s32 2, %v625
        %v627 = vrot.slane %v617, %v626
        %v628 = vlaneseq
        %v629 = vshrl.u32 %v628, 7
        %v630 = vsub.s32 2, %v629
        %v631 = vrot.slane %v621, %v630
        %v632 = vmul.f32 %v613, %v627
        %v633 = vmul.f32 %v612, %v631
        %v635 = vsel %vm511, %v494, 0
        %637 = vmatprep.subr.bf16.mxu0 0
        %638 = vmatpush1.bf16.msra.mxu0 0
        %639 = vmatprep.subr.bf16.mxu0 0
        %640 = vmatpush1.bf16.msra.mxu0 0
        %641 = vmatprep.subr.bf16.mxu0 0
        %642 = vmatpush1.bf16.msra.mxu0 0
        %643 = vmatprep.subr.bf16.mxu0 0
        %644 = vmatpush1.bf16.msra.mxu0 0
        %645 = vmatprep.subr.bf16.mxu0 0
        %646 = vmatpush1.bf16.msra.mxu0 0
        %647 = vmatprep.subr.bf16.mxu0 0
        %648 = vmatpush1.bf16.msra.mxu0 0
        %649 = vmatprep.subr.bf16.mxu0 %v520
        %650 = vmatpush1.bf16.msra.mxu0 %v517
        %651 = vmatprep.subr.bf16.mxu0 %v506
        %652 = vmatpush1.bf16.msra.mxu0 %v505
        %653 = vmatprep.subr.bf16.mxu0 0
        %654 = vmatpush2.bf16.msra.mxu0 0
        %655 = vmatprep.subr.bf16.mxu0 0
        %656 = vmatpush2.bf16.msra.mxu0 0
        %657 = vmatprep.subr.bf16.mxu0 0
        %658 = vmatpush2.bf16.msra.mxu0 0
        %659 = vmatprep.subr.bf16.mxu0 0
        %660 = vmatpush2.bf16.msra.mxu0 0
        %661 = vmatprep.subr.bf16.mxu0 0
        %662 = vmatpush2.bf16.msra.mxu0 0
        %663 = vmatprep.subr.bf16.mxu0 0
        %664 = vmatpush2.bf16.msra.mxu0 0
        %665 = vmatprep.subr.bf16.mxu0 0
        %666 = vmatpush2.bf16.msra.mxu0 0
        %667 = vmatprep.subr.bf16.mxu0 0
        %668 = vmatpush2.bf16.msra.mxu0 0
        %669 = vmatprep.mubr.bf16.mxu0 0
        %670 = vmatmul.mubr.bf16.gmra.mxu0 %v635
        %v671 = vpop.f32.mrf.mxu0
        %v672 = vadd.f32 %v632, %v671
        %v673 = vpop.f32.mrf.mxu0
        %v674 = vadd.f32 %v633, %v673
        %v675 = vpop.f32.mrf.mxu0
        %v676 = vpop.f32.mrf.mxu0
        %677 = vdwg.mxu0
        %678 = vrot.lane.b32.xlu0 %v601, 112
        %v679 = vpop.permute.xlu0 %678
        %680 = vrot.lane.b32.xlu0 %v603, 112
        %v681 = vpop.permute.xlu0 %680
        %vm682 = vcmp.lt.s32.totalorder %v411, 112
        %v683 = vsel %vm682, %v679, %v681
        %v684 = vsel %vm682, %v681, %v679
        %v685 = vlaneseq
        %v686 = vshrl.u32 %v685, 7
        %v687 = vsub.s32 3, %v686
        %v688 = vrot.slane %v403, %v687
        %v689 = vlaneseq
        %v690 = vshrl.u32 %v689, 7
        %v691 = vsub.s32 7, %v690
        %v692 = vrot.slane %v403, %v691
        %v695 = vlaneseq
        %v696 = vshrl.u32 %v695, 7
        %v697 = vsub.s32 3, %v696
        %v698 = vrot.slane %v688, %v697
        %v699 = vlaneseq
        %v700 = vshrl.u32 %v699, 7
        %v701 = vsub.s32 3, %v700
        %v702 = vrot.slane %v692, %v701
        %v703 = vmul.f32 %v683, %v698
        %v704 = vmul.f32 %v684, %v702
        %v705 = vadd.f32 %v672, %v703
        %v706 = vadd.f32 %v674, %v704
        %v707 = vld [vmem:[%s3] sm:$0xff]
        %709 = vset.pattern.permute.xlu0 0
        %710 = vperm.xlu0 %709, %v707
        %v711 = vpop.permute.xlu0 %710
        %v713 = vadd.f32 %v705, %v711
        %v714 = vadd.f32 %v706, %v711
        %v715 = vmax.f32 %v713, 0.0
        %v716 = vmax.f32 %v714, 0.0
        %717 = vrot.lane.b32.xlu0 %v715, 1
        %v718 = vpop.permute.xlu0 %717
        %719 = vrot.lane.b32.xlu0 %v716, 1
        %v720 = vpop.permute.xlu0 %719
        %v721 = vsel %vm412, %v718, %v720
        %v722 = vsel %vm412, %v720, %v718
        %v723 = vmul.f32 %v722, %v429
        %v724 = vmul.f32 %v721, %v433
        %725 = vrot.lane.b32.xlu0 %v715, 127
        %v726 = vpop.permute.xlu0 %725
        %727 = vrot.lane.b32.xlu0 %v716, 127
        %v728 = vpop.permute.xlu0 %727
        %v729 = vsel %vm440, %v726, %v728
        %v730 = vsel %vm440, %v728, %v726
        %v731 = vmul.f32 %v729, %v456
        %v732 = vmul.f32 %v730, %v460
        %v733 = vpack.c.bf16 %v723, %v723
        %v734 = vpack.c.bf16 %v724, %v724
        %v737 = vunpack.c.l.b16 %v733
        %v738 = vunpack.c.l.b16 %v734
        %v739 = vpack.c.b16 %v738, %v737
        %741 = vst [vmem:[#allocation2] sm:$0xff] %v739
        %v742 = vpack.c.bf16 %v715, %v715
        %v743 = vpack.c.bf16 %v716, %v716
        %v746 = vunpack.c.l.b16 %v742
        %v747 = vunpack.c.l.b16 %v743
        %v748 = vpack.c.b16 %v747, %v746
        %750 = vst [vmem:[#allocation2 + $0x8] sm:$0xff] %v748
        %v751 = vpack.c.bf16 %v731, %v731
        %v752 = vpack.c.bf16 %v732, %v732
        %v755 = vunpack.c.l.b16 %v751
        %v756 = vunpack.c.l.b16 %v752
        %v757 = vpack.c.b16 %v756, %v755
        %759 = vst [vmem:[#allocation2 + $0x10] sm:$0xff] %v757
        %v760 = vld [vmem:[#allocation2] sm:$0xff]
        %v761 = vld [vmem:[#allocation2 + $0x8] sm:$0xff]
        %v762 = vld [vmem:[#allocation2 + $0x10] sm:$0xff]
        %v763 = vld [vmem:[#allocation9] sm:$0xf]
        %v764 = vld [vmem:[#allocation9 + $0x4] sm:$0xf]
        %v765 = vld [vmem:[#allocation9 + $0x8] sm:$0xf]
        %v769 = vunpack.c.l.b16 %v760
        %v770 = vunpack.c.h.b16 %v760
        %v771 = vunpack.c.l.b16 %v761
        %v772 = vunpack.c.h.b16 %v761
        %v773 = vunpack.c.l.b16 %v762
        %v774 = vunpack.c.h.b16 %v762
        %v775 = vpack.c.b16 %v771, %v769
        %v776 = vpack.c.b16 %v772, %v770
        %v777 = vpack.c.b16 %v773, %v773
        %v778 = vpack.c.b16 %v774, %v774
        %v782 = vsel %vm511, %v763, 0
        %v785 = vsel %vm515, %v777, 0
        %v788 = vsel %vm515, %v778, 0
        %790 = vmatprep.subr.bf16.mxu0 0
        %791 = vmatpush1.bf16.msra.mxu0 0
        %792 = vmatprep.subr.bf16.mxu0 0
        %793 = vmatpush1.bf16.msra.mxu0 0
        %794 = vmatprep.subr.bf16.mxu0 0
        %795 = vmatpush1.bf16.msra.mxu0 0
        %796 = vmatprep.subr.bf16.mxu0 0
        %797 = vmatpush1.bf16.msra.mxu0 0
        %798 = vmatprep.subr.bf16.mxu0 0
        %799 = vmatpush1.bf16.msra.mxu0 0
        %800 = vmatprep.subr.bf16.mxu0 0
        %801 = vmatpush1.bf16.msra.mxu0 0
        %802 = vmatprep.subr.bf16.mxu0 %v788
        %803 = vmatpush1.bf16.msra.mxu0 %v785
        %804 = vmatprep.subr.bf16.mxu0 %v776
        %805 = vmatpush1.bf16.msra.mxu0 %v775
        %806 = vmatprep.subr.bf16.mxu0 0
        %807 = vmatpush2.bf16.msra.mxu0 0
        %808 = vmatprep.subr.bf16.mxu0 0
        %809 = vmatpush2.bf16.msra.mxu0 0
        %810 = vmatprep.subr.bf16.mxu0 0
        %811 = vmatpush2.bf16.msra.mxu0 0
        %812 = vmatprep.subr.bf16.mxu0 0
        %813 = vmatpush2.bf16.msra.mxu0 0
        %814 = vmatprep.subr.bf16.mxu0 0
        %815 = vmatpush2.bf16.msra.mxu0 0
        %816 = vmatprep.subr.bf16.mxu0 0
        %817 = vmatpush2.bf16.msra.mxu0 0
        %818 = vmatprep.subr.bf16.mxu0 0
        %819 = vmatpush2.bf16.msra.mxu0 0
        %820 = vmatprep.subr.bf16.mxu0 0
        %821 = vmatpush2.bf16.msra.mxu0 0
        %822 = vmatprep.mubr.bf16.mxu0 0
        %823 = vmatmul.mubr.bf16.gmra.mxu0 %v782
        %v824 = vpop.f32.mrf.mxu0
        %v825 = vadd.f32 0.0, %v824
        %v826 = vpop.f32.mrf.mxu0
        %v827 = vadd.f32 0.0, %v826
        %v828 = vpop.f32.mrf.mxu0
        %v829 = vpop.f32.mrf.mxu0
        %830 = vdwg.mxu0
        %v832 = vsel %vm511, %v765, 0
        %834 = vmatprep.subr.bf16.mxu0 0
        %835 = vmatpush1.bf16.msra.mxu0 0
        %836 = vmatprep.subr.bf16.mxu0 0
        %837 = vmatpush1.bf16.msra.mxu0 0
        %838 = vmatprep.subr.bf16.mxu0 0
        %839 = vmatpush1.bf16.msra.mxu0 0
        %840 = vmatprep.subr.bf16.mxu0 0
        %841 = vmatpush1.bf16.msra.mxu0 0
        %842 = vmatprep.subr.bf16.mxu0 0
        %843 = vmatpush1.bf16.msra.mxu0 0
        %844 = vmatprep.subr.bf16.mxu0 0
        %845 = vmatpush1.bf16.msra.mxu0 0
        %846 = vmatprep.subr.bf16.mxu0 %v788
        %847 = vmatpush1.bf16.msra.mxu0 %v785
        %848 = vmatprep.subr.bf16.mxu0 %v776
        %849 = vmatpush1.bf16.msra.mxu0 %v775
        %850 = vmatprep.subr.bf16.mxu0 0
        %851 = vmatpush2.bf16.msra.mxu0 0
        %852 = vmatprep.subr.bf16.mxu0 0
        %853 = vmatpush2.bf16.msra.mxu0 0
        %854 = vmatprep.subr.bf16.mxu0 0
        %855 = vmatpush2.bf16.msra.mxu0 0
        %856 = vmatprep.subr.bf16.mxu0 0
        %857 = vmatpush2.bf16.msra.mxu0 0
        %858 = vmatprep.subr.bf16.mxu0 0
        %859 = vmatpush2.bf16.msra.mxu0 0
        %860 = vmatprep.subr.bf16.mxu0 0
        %861 = vmatpush2.bf16.msra.mxu0 0
        %862 = vmatprep.subr.bf16.mxu0 0
        %863 = vmatpush2.bf16.msra.mxu0 0
        %864 = vmatprep.subr.bf16.mxu0 0
        %865 = vmatpush2.bf16.msra.mxu0 0
        %866 = vmatprep.mubr.bf16.mxu0 0
        %867 = vmatmul.mubr.bf16.gmra.mxu0 %v832
        %v868 = vpop.f32.mrf.mxu0
        %v869 = vadd.f32 0.0, %v868
        %v870 = vpop.f32.mrf.mxu0
        %v871 = vadd.f32 0.0, %v870
        %v872 = vpop.f32.mrf.mxu0
        %v873 = vpop.f32.mrf.mxu0
        %874 = vdwg.mxu0
        %875 = vrot.lane.b32.xlu0 %v825, 16
        %v876 = vpop.permute.xlu0 %875
        %877 = vrot.lane.b32.xlu0 %v827, 16
        %v878 = vpop.permute.xlu0 %877
        %v879 = vsel %vm611, %v876, %v878
        %v880 = vsel %vm611, %v878, %v876
        %v881 = vmul.f32 %v880, %v627
        %v882 = vmul.f32 %v879, %v631
        %v884 = vsel %vm511, %v764, 0
        %886 = vmatprep.subr.bf16.mxu0 0
        %887 = vmatpush1.bf16.msra.mxu0 0
        %888 = vmatprep.subr.bf16.mxu0 0
        %889 = vmatpush1.bf16.msra.mxu0 0
        %890 = vmatprep.subr.bf16.mxu0 0
        %891 = vmatpush1.bf16.msra.mxu0 0
        %892 = vmatprep.subr.bf16.mxu0 0
        %893 = vmatpush1.bf16.msra.mxu0 0
        %894 = vmatprep.subr.bf16.mxu0 0
        %895 = vmatpush1.bf16.msra.mxu0 0
        %896 = vmatprep.subr.bf16.mxu0 0
        %897 = vmatpush1.bf16.msra.mxu0 0
        %898 = vmatprep.subr.bf16.mxu0 %v788
        %899 = vmatpush1.bf16.msra.mxu0 %v785
        %900 = vmatprep.subr.bf16.mxu0 %v776
        %901 = vmatpush1.bf16.msra.mxu0 %v775
        %902 = vmatprep.subr.bf16.mxu0 0
        %903 = vmatpush2.bf16.msra.mxu0 0
        %904 = vmatprep.subr.bf16.mxu0 0
        %905 = vmatpush2.bf16.msra.mxu0 0
        %906 = vmatprep.subr.bf16.mxu0 0
        %907 = vmatpush2.bf16.msra.mxu0 0
        %908 = vmatprep.subr.bf16.mxu0 0
        %909 = vmatpush2.bf16.msra.mxu0 0
        %910 = vmatprep.subr.bf16.mxu0 0
        %911 = vmatpush2.bf16.msra.mxu0 0
        %912 = vmatprep.subr.bf16.mxu0 0
        %913 = vmatpush2.bf16.msra.mxu0 0
        %914 = vmatprep.subr.bf16.mxu0 0
        %915 = vmatpush2.bf16.msra.mxu0 0
        %916 = vmatprep.subr.bf16.mxu0 0
        %917 = vmatpush2.bf16.msra.mxu0 0
        %918 = vmatprep.mubr.bf16.mxu0 0
        %919 = vmatmul.mubr.bf16.gmra.mxu0 %v884
        %v920 = vpop.f32.mrf.mxu0
        %v921 = vadd.f32 %v881, %v920
        %v922 = vpop.f32.mrf.mxu0
        %v923 = vadd.f32 %v882, %v922
        %v924 = vpop.f32.mrf.mxu0
        %v925 = vpop.f32.mrf.mxu0
        %926 = vdwg.mxu0
        %927 = vrot.lane.b32.xlu0 %v869, 112
        %v928 = vpop.permute.xlu0 %927
        %929 = vrot.lane.b32.xlu0 %v871, 112
        %v930 = vpop.permute.xlu0 %929
        %v931 = vsel %vm682, %v928, %v930
        %v932 = vsel %vm682, %v930, %v928
        %v933 = vmul.f32 %v931, %v698
        %v934 = vmul.f32 %v932, %v702
        %v935 = vadd.f32 %v921, %v933
        %v936 = vadd.f32 %v923, %v934
        %v937 = vld [vmem:[%s5] sm:$0xff]
        %939 = vset.pattern.permute.xlu0 0
        %940 = vperm.xlu0 %939, %v937
        %v941 = vpop.permute.xlu0 %940
        %v943 = vadd.f32 %v935, %v941
        %v944 = vadd.f32 %v936, %v941
        %v945 = vmax.f32 %v943, 0.0
        %v946 = vmax.f32 %v944, 0.0
        %947 = vrot.lane.b32.xlu0 %v945, 1
        %v948 = vpop.permute.xlu0 %947
        %949 = vrot.lane.b32.xlu0 %v946, 1
        %v950 = vpop.permute.xlu0 %949
        %v951 = vsel %vm412, %v948, %v950
        %v952 = vsel %vm412, %v950, %v948
        %v953 = vmul.f32 %v952, %v429
        %v954 = vmul.f32 %v951, %v433
        %955 = vrot.lane.b32.xlu0 %v945, 127
        %v956 = vpop.permute.xlu0 %955
        %957 = vrot.lane.b32.xlu0 %v946, 127
        %v958 = vpop.permute.xlu0 %957
        %v959 = vsel %vm440, %v956, %v958
        %v960 = vsel %vm440, %v958, %v956
        %v961 = vmul.f32 %v959, %v456
        %v962 = vmul.f32 %v960, %v460
        %v963 = vpack.c.bf16 %v953, %v953
        %v964 = vpack.c.bf16 %v954, %v954
        %v967 = vunpack.c.l.b16 %v963
        %v968 = vunpack.c.l.b16 %v964
        %v969 = vpack.c.b16 %v968, %v967
        %971 = vst [vmem:[#allocation2] sm:$0xff] %v969
        %v972 = vpack.c.bf16 %v945, %v945
        %v973 = vpack.c.bf16 %v946, %v946
        %v976 = vunpack.c.l.b16 %v972
        %v977 = vunpack.c.l.b16 %v973
        %v978 = vpack.c.b16 %v977, %v976
        %980 = vst [vmem:[#allocation2 + $0x8] sm:$0xff] %v978
        %v981 = vpack.c.bf16 %v961, %v961
        %v982 = vpack.c.bf16 %v962, %v962
        %v985 = vunpack.c.l.b16 %v981
        %v986 = vunpack.c.l.b16 %v982
        %v987 = vpack.c.b16 %v986, %v985
        %989 = vst [vmem:[#allocation2 + $0x10] sm:$0xff] %v987
        %v990 = vld [vmem:[#allocation2] sm:$0xff]
        %v991 = vld [vmem:[#allocation2 + $0x8] sm:$0xff]
        %v992 = vld [vmem:[#allocation2 + $0x10] sm:$0xff]
        %v993 = vld [vmem:[%s6] sm:$0xf]
        %v994 = vld [vmem:[%s6 + $0x4] sm:$0xf]
        %v995 = vld [vmem:[%s6 + $0x8] sm:$0xf]
        %v999 = vunpack.c.l.b16 %v990
        %v1000 = vunpack.c.h.b16 %v990
        %v1001 = vunpack.c.l.b16 %v991
        %v1002 = vunpack.c.h.b16 %v991
        %v1003 = vunpack.c.l.b16 %v992
        %v1004 = vunpack.c.h.b16 %v992
        %v1005 = vpack.c.b16 %v1001, %v999
        %v1006 = vpack.c.b16 %v1002, %v1000
        %v1007 = vpack.c.b16 %v1003, %v1003
        %v1008 = vpack.c.b16 %v1004, %v1004
        %v1012 = vsel %vm511, %v993, 0
        %v1015 = vsel %vm515, %v1007, 0
        %v1018 = vsel %vm515, %v1008, 0
        %1020 = vmatprep.subr.bf16.mxu0 0
        %1021 = vmatpush1.bf16.msra.mxu0 0
        %1022 = vmatprep.subr.bf16.mxu0 0
        %1023 = vmatpush1.bf16.msra.mxu0 0
        %1024 = vmatprep.subr.bf16.mxu0 0
        %1025 = vmatpush1.bf16.msra.mxu0 0
        %1026 = vmatprep.subr.bf16.mxu0 0
        %1027 = vmatpush1.bf16.msra.mxu0 0
        %1028 = vmatprep.subr.bf16.mxu0 0
        %1029 = vmatpush1.bf16.msra.mxu0 0
        %1030 = vmatprep.subr.bf16.mxu0 0
        %1031 = vmatpush1.bf16.msra.mxu0 0
        %1032 = vmatprep.subr.bf16.mxu0 %v1018
        %1033 = vmatpush1.bf16.msra.mxu0 %v1015
        %1034 = vmatprep.subr.bf16.mxu0 %v1006
        %1035 = vmatpush1.bf16.msra.mxu0 %v1005
        %1036 = vmatprep.subr.bf16.mxu0 0
        %1037 = vmatpush2.bf16.msra.mxu0 0
        %1038 = vmatprep.subr.bf16.mxu0 0
        %1039 = vmatpush2.bf16.msra.mxu0 0
        %1040 = vmatprep.subr.bf16.mxu0 0
        %1041 = vmatpush2.bf16.msra.mxu0 0
        %1042 = vmatprep.subr.bf16.mxu0 0
        %1043 = vmatpush2.bf16.msra.mxu0 0
        %1044 = vmatprep.subr.bf16.mxu0 0
        %1045 = vmatpush2.bf16.msra.mxu0 0
        %1046 = vmatprep.subr.bf16.mxu0 0
        %1047 = vmatpush2.bf16.msra.mxu0 0
        %1048 = vmatprep.subr.bf16.mxu0 0
        %1049 = vmatpush2.bf16.msra.mxu0 0
        %1050 = vmatprep.subr.bf16.mxu0 0
        %1051 = vmatpush2.bf16.msra.mxu0 0
        %1052 = vmatprep.mubr.bf16.mxu0 0
        %1053 = vmatmul.mubr.bf16.gmra.mxu0 %v1012
        %v1054 = vpop.f32.mrf.mxu0
        %v1055 = vadd.f32 0.0, %v1054
        %v1056 = vpop.f32.mrf.mxu0
        %v1057 = vadd.f32 0.0, %v1056
        %v1058 = vpop.f32.mrf.mxu0
        %v1059 = vpop.f32.mrf.mxu0
        %1060 = vdwg.mxu0
        %v1062 = vsel %vm511, %v995, 0
        %1064 = vmatprep.subr.bf16.mxu0 0
        %1065 = vmatpush1.bf16.msra.mxu0 0
        %1066 = vmatprep.subr.bf16.mxu0 0
        %1067 = vmatpush1.bf16.msra.mxu0 0
        %1068 = vmatprep.subr.bf16.mxu0 0
        %1069 = vmatpush1.bf16.msra.mxu0 0
        %1070 = vmatprep.subr.bf16.mxu0 0
        %1071 = vmatpush1.bf16.msra.mxu0 0
        %1072 = vmatprep.subr.bf16.mxu0 0
        %1073 = vmatpush1.bf16.msra.mxu0 0
        %1074 = vmatprep.subr.bf16.mxu0 0
        %1075 = vmatpush1.bf16.msra.mxu0 0
        %1076 = vmatprep.subr.bf16.mxu0 %v1018
        %1077 = vmatpush1.bf16.msra.mxu0 %v1015
        %1078 = vmatprep.subr.bf16.mxu0 %v1006
        %1079 = vmatpush1.bf16.msra.mxu0 %v1005
        %1080 = vmatprep.subr.bf16.mxu0 0
        %1081 = vmatpush2.bf16.msra.mxu0 0
        %1082 = vmatprep.subr.bf16.mxu0 0
        %1083 = vmatpush2.bf16.msra.mxu0 0
        %1084 = vmatprep.subr.bf16.mxu0 0
        %1085 = vmatpush2.bf16.msra.mxu0 0
        %1086 = vmatprep.subr.bf16.mxu0 0
        %1087 = vmatpush2.bf16.msra.mxu0 0
        %1088 = vmatprep.subr.bf16.mxu0 0
        %1089 = vmatpush2.bf16.msra.mxu0 0
        %1090 = vmatprep.subr.bf16.mxu0 0
        %1091 = vmatpush2.bf16.msra.mxu0 0
        %1092 = vmatprep.subr.bf16.mxu0 0
        %1093 = vmatpush2.bf16.msra.mxu0 0
        %1094 = vmatprep.subr.bf16.mxu0 0
        %1095 = vmatpush2.bf16.msra.mxu0 0
        %1096 = vmatprep.mubr.bf16.mxu0 0
        %1097 = vmatmul.mubr.bf16.gmra.mxu0 %v1062
        %v1098 = vpop.f32.mrf.mxu0
        %v1099 = vadd.f32 0.0, %v1098
        %v1100 = vpop.f32.mrf.mxu0
        %v1101 = vadd.f32 0.0, %v1100
        %v1102 = vpop.f32.mrf.mxu0
        %v1103 = vpop.f32.mrf.mxu0
        %1104 = vdwg.mxu0
        %1105 = vrot.lane.b32.xlu0 %v1055, 16
        %v1106 = vpop.permute.xlu0 %1105
        %1107 = vrot.lane.b32.xlu0 %v1057, 16
        %v1108 = vpop.permute.xlu0 %1107
        %v1109 = vsel %vm611, %v1106, %v1108
        %v1110 = vsel %vm611, %v1108, %v1106
        %v1111 = vmul.f32 %v1110, %v627
        %v1112 = vmul.f32 %v1109, %v631
        %v1114 = vsel %vm511, %v994, 0
        %1116 = vmatprep.subr.bf16.mxu0 0
        %1117 = vmatpush1.bf16.msra.mxu0 0
        %1118 = vmatprep.subr.bf16.mxu0 0
        %1119 = vmatpush1.bf16.msra.mxu0 0
        %1120 = vmatprep.subr.bf16.mxu0 0
        %1121 = vmatpush1.bf16.msra.mxu0 0
        %1122 = vmatprep.subr.bf16.mxu0 0
        %1123 = vmatpush1.bf16.msra.mxu0 0
        %1124 = vmatprep.subr.bf16.mxu0 0
        %1125 = vmatpush1.bf16.msra.mxu0 0
        %1126 = vmatprep.subr.bf16.mxu0 0
        %1127 = vmatpush1.bf16.msra.mxu0 0
        %1128 = vmatprep.subr.bf16.mxu0 %v1018
        %1129 = vmatpush1.bf16.msra.mxu0 %v1015
        %1130 = vmatprep.subr.bf16.mxu0 %v1006
        %1131 = vmatpush1.bf16.msra.mxu0 %v1005
        %1132 = vmatprep.subr.bf16.mxu0 0
        %1133 = vmatpush2.bf16.msra.mxu0 0
        %1134 = vmatprep.subr.bf16.mxu0 0
        %1135 = vmatpush2.bf16.msra.mxu0 0
        %1136 = vmatprep.subr.bf16.mxu0 0
        %1137 = vmatpush2.bf16.msra.mxu0 0
        %1138 = vmatprep.subr.bf16.mxu0 0
        %1139 = vmatpush2.bf16.msra.mxu0 0
        %1140 = vmatprep.subr.bf16.mxu0 0
        %1141 = vmatpush2.bf16.msra.mxu0 0
        %1142 = vmatprep.subr.bf16.mxu0 0
        %1143 = vmatpush2.bf16.msra.mxu0 0
        %1144 = vmatprep.subr.bf16.mxu0 0
        %1145 = vmatpush2.bf16.msra.mxu0 0
        %1146 = vmatprep.subr.bf16.mxu0 0
        %1147 = vmatpush2.bf16.msra.mxu0 0
        %1148 = vmatprep.mubr.bf16.mxu0 0
        %1149 = vmatmul.mubr.bf16.gmra.mxu0 %v1114
        %v1150 = vpop.f32.mrf.mxu0
        %v1151 = vadd.f32 %v1111, %v1150
        %v1152 = vpop.f32.mrf.mxu0
        %v1153 = vadd.f32 %v1112, %v1152
        %v1154 = vpop.f32.mrf.mxu0
        %v1155 = vpop.f32.mrf.mxu0
        %1156 = vdwg.mxu0
        %1157 = vrot.lane.b32.xlu0 %v1099, 112
        %v1158 = vpop.permute.xlu0 %1157
        %1159 = vrot.lane.b32.xlu0 %v1101, 112
        %v1160 = vpop.permute.xlu0 %1159
        %v1161 = vsel %vm682, %v1158, %v1160
        %v1162 = vsel %vm682, %v1160, %v1158
        %v1163 = vmul.f32 %v1161, %v698
        %v1164 = vmul.f32 %v1162, %v702
        %v1165 = vadd.f32 %v1151, %v1163
        %v1166 = vadd.f32 %v1153, %v1164
        %v1167 = vld [vmem:[%s7] sm:$0xff]
        %1169 = vset.pattern.permute.xlu0 0
        %1170 = vperm.xlu0 %1169, %v1167
        %v1171 = vpop.permute.xlu0 %1170
        %v1173 = vadd.f32 %v1165, %v1171
        %v1174 = vadd.f32 %v1166, %v1171
        %v1175 = vmax.f32 %v1173, 0.0
        %v1176 = vmax.f32 %v1174, 0.0
        %1177 = vrot.lane.b32.xlu0 %v1175, 1
        %v1178 = vpop.permute.xlu0 %1177
        %1179 = vrot.lane.b32.xlu0 %v1176, 1
        %v1180 = vpop.permute.xlu0 %1179
        %v1181 = vsel %vm412, %v1178, %v1180
        %v1182 = vsel %vm412, %v1180, %v1178
        %v1183 = vmul.f32 %v1182, %v429
        %v1184 = vmul.f32 %v1181, %v433
        %1185 = vrot.lane.b32.xlu0 %v1175, 127
        %v1186 = vpop.permute.xlu0 %1185
        %1187 = vrot.lane.b32.xlu0 %v1176, 127
        %v1188 = vpop.permute.xlu0 %1187
        %v1189 = vsel %vm440, %v1186, %v1188
        %v1190 = vsel %vm440, %v1188, %v1186
        %v1191 = vmul.f32 %v1189, %v456
        %v1192 = vmul.f32 %v1190, %v460
        %v1193 = vpack.c.bf16 %v1183, %v1183
        %v1194 = vpack.c.bf16 %v1184, %v1184
        %v1197 = vunpack.c.l.b16 %v1193
        %v1198 = vunpack.c.l.b16 %v1194
        %v1199 = vpack.c.b16 %v1198, %v1197
        %1201 = vst [vmem:[#allocation2] sm:$0xff] %v1199
        %v1202 = vpack.c.bf16 %v1175, %v1175
        %v1203 = vpack.c.bf16 %v1176, %v1176
        %v1206 = vunpack.c.l.b16 %v1202
        %v1207 = vunpack.c.l.b16 %v1203
        %v1208 = vpack.c.b16 %v1207, %v1206
        %1210 = vst [vmem:[#allocation2 + $0x8] sm:$0xff] %v1208
        %v1211 = vpack.c.bf16 %v1191, %v1191
        %v1212 = vpack.c.bf16 %v1192, %v1192
        %v1215 = vunpack.c.l.b16 %v1211
        %v1216 = vunpack.c.l.b16 %v1212
        %v1217 = vpack.c.b16 %v1216, %v1215
        %1219 = vst [vmem:[#allocation2 + $0x10] sm:$0xff] %v1217
        %v1220 = vld [vmem:[#allocation2] sm:$0xff]
        %v1221 = vld [vmem:[#allocation2 + $0x8] sm:$0xff]
        %v1222 = vld [vmem:[#allocation2 + $0x10] sm:$0xff]
        %v1223 = vld [vmem:[%s8] sm:$0x1]
        %v1224 = vld [vmem:[%s8 + $0x1] sm:$0x1]
        %v1225 = vld [vmem:[%s8 + $0x2] sm:$0x1]
        %v1229 = vunpack.c.l.b16 %v1220
        %v1230 = vunpack.c.h.b16 %v1220
        %v1231 = vunpack.c.l.b16 %v1221
        %v1232 = vunpack.c.h.b16 %v1221
        %v1233 = vunpack.c.l.b16 %v1222
        %v1234 = vunpack.c.h.b16 %v1222
        %v1235 = vpack.c.b16 %v1231, %v1229
        %v1236 = vpack.c.b16 %v1232, %v1230
        %v1237 = vpack.c.b16 %v1233, %v1233
        %v1238 = vpack.c.b16 %v1234, %v1234
        %v1242 = vsel %vm511, %v1223, 0
        %v1245 = vsel %vm515, %v1237, 0
        %v1248 = vsel %vm515, %v1238, 0
        %1250 = vmatprep.subr.bf16.mxu0 0
        %1251 = vmatpush1.bf16.msra.mxu0 0
        %1252 = vmatprep.subr.bf16.mxu0 0
        %1253 = vmatpush1.bf16.msra.mxu0 0
        %1254 = vmatprep.subr.bf16.mxu0 0
        %1255 = vmatpush1.bf16.msra.mxu0 0
        %1256 = vmatprep.subr.bf16.mxu0 0
        %1257 = vmatpush1.bf16.msra.mxu0 0
        %1258 = vmatprep.subr.bf16.mxu0 0
        %1259 = vmatpush1.bf16.msra.mxu0 0
        %1260 = vmatprep.subr.bf16.mxu0 0
        %1261 = vmatpush1.bf16.msra.mxu0 0
        %1262 = vmatprep.subr.bf16.mxu0 %v1248
        %1263 = vmatpush1.bf16.msra.mxu0 %v1245
        %1264 = vmatprep.subr.bf16.mxu0 %v1236
        %1265 = vmatpush1.bf16.msra.mxu0 %v1235
        %1266 = vmatprep.subr.bf16.mxu0 0
        %1267 = vmatpush2.bf16.msra.mxu0 0
        %1268 = vmatprep.subr.bf16.mxu0 0
        %1269 = vmatpush2.bf16.msra.mxu0 0
        %1270 = vmatprep.subr.bf16.mxu0 0
        %1271 = vmatpush2.bf16.msra.mxu0 0
        %1272 = vmatprep.subr.bf16.mxu0 0
        %1273 = vmatpush2.bf16.msra.mxu0 0
        %1274 = vmatprep.subr.bf16.mxu0 0
        %1275 = vmatpush2.bf16.msra.mxu0 0
        %1276 = vmatprep.subr.bf16.mxu0 0
        %1277 = vmatpush2.bf16.msra.mxu0 0
        %1278 = vmatprep.subr.bf16.mxu0 0
        %1279 = vmatpush2.bf16.msra.mxu0 0
        %1280 = vmatprep.subr.bf16.mxu0 0
        %1281 = vmatpush2.bf16.msra.mxu0 0
        %1282 = vmatprep.mubr.bf16.mxu0 0
        %1283 = vmatmul.mubr.bf16.gmra.mxu0 %v1242
        %v1284 = vpop.f32.mrf.mxu0
        %v1285 = vadd.f32 0.0, %v1284
        %v1286 = vpop.f32.mrf.mxu0
        %v1287 = vadd.f32 0.0, %v1286
        %v1288 = vpop.f32.mrf.mxu0
        %v1289 = vpop.f32.mrf.mxu0
        %1290 = vdwg.mxu0
        %v1292 = vsel %vm511, %v1225, 0
        %1294 = vmatprep.subr.bf16.mxu0 0
        %1295 = vmatpush1.bf16.msra.mxu0 0
        %1296 = vmatprep.subr.bf16.mxu0 0
        %1297 = vmatpush1.bf16.msra.mxu0 0
        %1298 = vmatprep.subr.bf16.mxu0 0
        %1299 = vmatpush1.bf16.msra.mxu0 0
        %1300 = vmatprep.subr.bf16.mxu0 0
        %1301 = vmatpush1.bf16.msra.mxu0 0
        %1302 = vmatprep.subr.bf16.mxu0 0
        %1303 = vmatpush1.bf16.msra.mxu0 0
        %1304 = vmatprep.subr.bf16.mxu0 0
        %1305 = vmatpush1.bf16.msra.mxu0 0
        %1306 = vmatprep.subr.bf16.mxu0 %v1248
        %1307 = vmatpush1.bf16.msra.mxu0 %v1245
        %1308 = vmatprep.subr.bf16.mxu0 %v1236
        %1309 = vmatpush1.bf16.msra.mxu0 %v1235
        %1310 = vmatprep.subr.bf16.mxu0 0
        %1311 = vmatpush2.bf16.msra.mxu0 0
        %1312 = vmatprep.subr.bf16.mxu0 0
        %1313 = vmatpush2.bf16.msra.mxu0 0
        %1314 = vmatprep.subr.bf16.mxu0 0
        %1315 = vmatpush2.bf16.msra.mxu0 0
        %1316 = vmatprep.subr.bf16.mxu0 0
        %1317 = vmatpush2.bf16.msra.mxu0 0
        %1318 = vmatprep.subr.bf16.mxu0 0
        %1319 = vmatpush2.bf16.msra.mxu0 0
        %1320 = vmatprep.subr.bf16.mxu0 0
        %1321 = vmatpush2.bf16.msra.mxu0 0
        %1322 = vmatprep.subr.bf16.mxu0 0
        %1323 = vmatpush2.bf16.msra.mxu0 0
        %1324 = vmatprep.subr.bf16.mxu0 0
        %1325 = vmatpush2.bf16.msra.mxu0 0
        %1326 = vmatprep.mubr.bf16.mxu0 0
        %1327 = vmatmul.mubr.bf16.gmra.mxu0 %v1292
        %v1328 = vpop.f32.mrf.mxu0
        %v1329 = vadd.f32 0.0, %v1328
        %v1330 = vpop.f32.mrf.mxu0
        %v1331 = vadd.f32 0.0, %v1330
        %v1332 = vpop.f32.mrf.mxu0
        %v1333 = vpop.f32.mrf.mxu0
        %1334 = vdwg.mxu0
        %1335 = vrot.lane.b32.xlu0 %v1285, 16
        %v1336 = vpop.permute.xlu0 %1335
        %1337 = vrot.lane.b32.xlu0 %v1287, 16
        %v1338 = vpop.permute.xlu0 %1337
        %v1339 = vsel %vm611, %v1336, %v1338
        %v1340 = vsel %vm611, %v1338, %v1336
        %v1341 = vmul.f32 %v1340, %v617
        %v1342 = vmul.f32 %v1339, %v621
        %v1344 = vsel %vm511, %v1224, 0
        %1346 = vmatprep.subr.bf16.mxu0 0
        %1347 = vmatpush1.bf16.msra.mxu0 0
        %1348 = vmatprep.subr.bf16.mxu0 0
        %1349 = vmatpush1.bf16.msra.mxu0 0
        %1350 = vmatprep.subr.bf16.mxu0 0
        %1351 = vmatpush1.bf16.msra.mxu0 0
        %1352 = vmatprep.subr.bf16.mxu0 0
        %1353 = vmatpush1.bf16.msra.mxu0 0
        %1354 = vmatprep.subr.bf16.mxu0 0
        %1355 = vmatpush1.bf16.msra.mxu0 0
        %1356 = vmatprep.subr.bf16.mxu0 0
        %1357 = vmatpush1.bf16.msra.mxu0 0
        %1358 = vmatprep.subr.bf16.mxu0 %v1248
        %1359 = vmatpush1.bf16.msra.mxu0 %v1245
        %1360 = vmatprep.subr.bf16.mxu0 %v1236
        %1361 = vmatpush1.bf16.msra.mxu0 %v1235
        %1362 = vmatprep.subr.bf16.mxu0 0
        %1363 = vmatpush2.bf16.msra.mxu0 0
        %1364 = vmatprep.subr.bf16.mxu0 0
        %1365 = vmatpush2.bf16.msra.mxu0 0
        %1366 = vmatprep.subr.bf16.mxu0 0
        %1367 = vmatpush2.bf16.msra.mxu0 0
        %1368 = vmatprep.subr.bf16.mxu0 0
        %1369 = vmatpush2.bf16.msra.mxu0 0
        %1370 = vmatprep.subr.bf16.mxu0 0
        %1371 = vmatpush2.bf16.msra.mxu0 0
        %1372 = vmatprep.subr.bf16.mxu0 0
        %1373 = vmatpush2.bf16.msra.mxu0 0
        %1374 = vmatprep.subr.bf16.mxu0 0
        %1375 = vmatpush2.bf16.msra.mxu0 0
        %1376 = vmatprep.subr.bf16.mxu0 0
        %1377 = vmatpush2.bf16.msra.mxu0 0
        %1378 = vmatprep.mubr.bf16.mxu0 0
        %1379 = vmatmul.mubr.bf16.gmra.mxu0 %v1344
        %v1380 = vpop.f32.mrf.mxu0
        %v1381 = vadd.f32 %v1341, %v1380
        %v1382 = vpop.f32.mrf.mxu0
        %v1383 = vadd.f32 %v1342, %v1382
        %v1384 = vpop.f32.mrf.mxu0
        %v1385 = vpop.f32.mrf.mxu0
        %1386 = vdwg.mxu0
        %1387 = vrot.lane.b32.xlu0 %v1329, 112
        %v1388 = vpop.permute.xlu0 %1387
        %1389 = vrot.lane.b32.xlu0 %v1331, 112
        %v1390 = vpop.permute.xlu0 %1389
        %v1391 = vsel %vm682, %v1388, %v1390
        %v1392 = vsel %vm682, %v1390, %v1388
        %v1393 = vmul.f32 %v1391, %v688
        %v1394 = vmul.f32 %v1392, %v692
        %v1395 = vadd.f32 %v1381, %v1393
        %v1396 = vadd.f32 %v1383, %v1394
        %v1397 = vld [vmem:[#allocation3] sm:$0x1]
        %1399 = vset.pattern.permute.xlu0 0
        %1400 = vperm.xlu0 %1399, %v1397
        %v1401 = vpop.permute.xlu0 %1400
        %v1403 = vlaneseq
        %v1404 = vshrl.u32 %v1403, 7
        %v1405 = vsub.s32 0, %v1404
        %v1406 = vrot.slane %v1401, %v1405
        %v1407 = vadd.f32 %v1395, %v1406
        %v1408 = vadd.f32 %v1396, %v1406
        %v1411 = vrot.slane %v1407, 5
        %v1412 = vrot.slane %v1408, 5
        %v1415 = vadd.f32 %v404, %v1411
        %v1416 = vadd.f32 %v405, %v1412
        %v1419 = vcombine.low %v1415, %v1416
        %v1421 = vunpack.c.l.s4 1966171168
        %v1422 = vunpack.c.0.s8 %v1421
        %v1423 = vlaneseq
        %v1424 = vshrl.u32 %v1423, 7
        %v1425 = vsub.s32 %v1422, %v1424
        %v1426 = vrot.slane %v1419, %v1425
        %v1427 = vcombine.high %v1426, %v1426
        %v1429 = vunpack.c.l.s4 1966171168
        %v1430 = vunpack.c.0.s8 %v1429
        %v1431 = vlaneseq
        %v1432 = vshrl.u32 %v1431, 7
        %v1433 = vsub.s32 %v1430, %v1432
        %v1434 = vrot.slane %v1427, %v1433
        %v1435 = vcombine.high %v1434, %v1434
        %v1437 = vlaneseq
        %vm1438 = vcmp.ge.s32.totalorder %v1437, 0
        %vm1439 = vcmp.lt.s32.totalorder %v1437, 256
        %vm1440 = vmand %vm1438, %vm1439
        %1441 = vst.msk [vmem:[%s396] sm:$0x3] %vm1440, %v1435
        %s1442 = sand.u32 %s251, 1
        %s1443 = scalar_lea.sflag [#allocation6], %s1442
        %s1444 = sand.u32 %s251, 1
        %s1445 = smul.addr %s1444, 2
        %s1446 = scalar_lea.vmem [#allocation10], %s1445
        // Predicated region
        $region73: #{tpu_custom_call.1} parent=59 // pred_check
          %p1447 = pneg %p261
        $region74: #{tpu_custom_call.1} parent=59 // pred_check_branch
          %1449 = sbr.rel (%p1447) target = $region76
        $region75: #{tpu_custom_call.1} parent=59 // pred_region
          %s1451 = ssub.s32 32, 32
          %1452 = vsyncadd %s1443, %s1451
          %s1453 = smul.addr %s28, 2
          %s1454 = smul.addr %s1453, 16
          %s1455 = scalar_lea.hbm %s10, %s1454
          %s1457 = sshll.u32 %s1446, 4
          %s1458 = int_to_ptr.vmem [resolvable:$true] %s1457
          %1460 = dma.vmem_to_hbm [thread:$0]  %s1458, 32, %s1455, %s1443
        $region76: #{tpu_custom_call.1} parent=59 // pred_fallthru
          _
      $region60: #{tpu_custom_call.1} parent=5 // pred_fallthru
        _
      %p1461 = scmp.le.s32.totalorder 2, %s23
      // Predicated region
      $region77: #{tpu_custom_call.1} parent=5 // pred_check
        %p1462 = pneg %p1461
      $region78: #{tpu_custom_call.1} parent=5 // pred_check_branch
        %1464 = sbr.rel (%p1462) target = $region80
      $region79: #{tpu_custom_call.1} parent=5 // pred_region
        %s1465 = ssub.s32 %s23, 2
        // Predicated region
        $region81: #{tpu_custom_call.1} parent=79 // pred_check
          %p1466 = pneg %p267
        $region82: #{tpu_custom_call.1} parent=79 // pred_check_branch
          %1468 = sbr.rel (%p1466) target = $region84
        $region83: #{tpu_custom_call.1} parent=79 // pred_region
          %s1469 = sand.u32 %s252, 1
          %s1470 = scalar_lea.sflag [#allocation6], %s1469
          %s1471 = sand.u32 %s252, 1
          %s1472 = smul.addr %s1471, 2
          %s1473 = scalar_lea.vmem [#allocation10], %s1472
          %1474 = dma.done %s1470, 32
        $region84: #{tpu_custom_call.1} parent=79 // pred_fallthru
          _
      $region80: #{tpu_custom_call.1} parent=5 // pred_fallthru
        _
    $region6: #{tpu_custom_call.1} parent=1 // loop_footer
      %s27 = sadd.s32 1, %s23
    $region7: #{tpu_custom_call.1} parent=1 // loop_footer_branch
      %22 = sbr.rel target = $region3
    $region8: #{tpu_custom_call.1} parent=1 // loop_exit
      _
    %1475 = vsyncpa [#allocation5], 1
    %s1476 = scalar_lea.sflag [#allocation5], 1
    %1477 = vsyncpa %s1476, 1
    %1478 = vsyncpa [#allocation8], 1
    %1479 = vsyncpa [#allocation6], 1
    %s1480 = scalar_lea.sflag [#allocation6], 1
    %1481 = vsyncpa %s1480, 1

</llo_original>
